<compile_context>
chip_gen: v6e
topology: v6e:2x2x1
jax: 0.10.0
libtpu: 0.0.40
codegen_flags: <defaults>
</compile_context>

<pallas_src>
import functools

import jax
import jax.numpy as jnp
from jax.experimental import pallas as pl
from jax.experimental.pallas import tpu as pltpu

_LANE = 128
_SUB = 8


def _round_up(x, m):
    return (x + m - 1) // m * m


@functools.lru_cache(maxsize=1)
def _vmem_limit_bytes():
    """Generation-aware scoped-VMEM limit (v7x: 64 MiB phys, v5e/v6e: 128 MiB)."""
    phys = 64 * 1024 * 1024                       # v7x-safe fallback
    try:
        info = pltpu.get_tpu_info()
        cap = getattr(info, "vmem_capacity_bytes", None)
        if cap:
            phys = int(cap)
    except Exception:
        pass
    # v7x (64 MiB) -> ~38 MiB limit; v5e/v6e (128 MiB) -> ~77 MiB limit.
    return min(int(phys * 0.6), 96 * 1024 * 1024)


def _pick_tile_h(H, W, Cin, Coutp, TW, in_bytes, w_bytes, dw_bytes, budget_bytes):
    """Largest row-tile TH (multiple of 8) whose padded VMEM footprint fits."""
    Lwp = _round_up((W + 2) * Cin, _LANE)          # input lanes (padded)
    Wcp = _round_up(W * Cin, _LANE)                # depthwise lanes (padded)
    out_l = W * Coutp                              # output lanes (128-aligned)
    nc = TW * Coutp

    # Grid-constant parameter blocks (conservatively counted double-buffered).
    fixed = 2 * (_round_up(9, _SUB) * Wcp * 4                 # dwl
                 + _SUB * Wcp * 4                             # b1l
                 + _round_up(TW * Cin, _SUB) * nc * w_bytes   # pwk
                 + 2 * _SUB * nc * 4)                         # s2k, b2k

    def step_bytes(th):
        in_main = th * Lwp * in_bytes
        in_halo = _SUB * Lwp * in_bytes
        out_blk = th * out_l * in_bytes
        # Live in-kernel values: halo window + 3 shifted views + acc/h + one
        # matmul chunk of the output.
        live = ((th + _SUB) * Lwp * dw_bytes
                + 3 * (th + _SUB) * Wcp * dw_bytes
                + 2 * th * Wcp * 4
                + th * nc * 4)
        return 2 * (in_main + in_halo + out_blk) + live

    th = _SUB
    for cand in (2048, 1024, 512, 384, 256, 192, 128, 96, 64, 48, 32, 24, 16, 8):
        if fixed + step_bytes(cand) <= budget_bytes:
            th = cand
            break
    h_eff = _round_up(max(H, 1), _SUB)
    th = min(th, h_eff)
    # Prefer >= 2 row tiles per image so both v7x TensorCores / the DMA
    # pipeline have work even at batch == 1.
    if th >= h_eff and h_eff >= 2 * _SUB:
        th = _round_up(h_eff // 2, _SUB)
    return th


def _dsconv_kernel(xa_ref, xb_ref, dwl_ref, b1l_ref, pwk_ref, s2k_ref, b2k_ref,
                   out_ref, *, cin, w, tw, dw_dtype):
    # xa_ref : (TH, (W+2)*Cin)   main rows of the row-padded, (x,c)-flat input
    # xb_ref : (8,  (W+2)*Cin)   bottom-halo rows (only the first 2 are used)
    # dwl_ref: (9, W*Cin)        per-tap lane weights dwl[k, x*Cin+c]=s1[c]*w[c,k]
    # b1l_ref: (1, W*Cin)        folded BN1 bias, tiled across x
    # pwk_ref: (TW*Cin, TW*Coutp) block-diagonal pointwise weight kron(I_TW, pw)
    # s2k_ref: (1, TW*Coutp)     folded BN2 scale (tiled, applied in f32)
    # b2k_ref: (1, TW*Coutp)     folded BN2 bias  (tiled)
    # out_ref: (TH, W*Coutp)
    th = xa_ref.shape[0]
    wc = w * cin

    # (TH+2)-row halo window as a value; everything below stays lane-dense
    # ((x, c) packed on the lane axis) -> no relayouts, no VMEM scratch.
    xw = jnp.concatenate([xa_ref[...], xb_ref[0:2, :]], axis=0).astype(dw_dtype)
    dwl = dwl_ref[...].astype(dw_dtype)

    # dx in {0,1,2} column shifts, precomputed once and reused for the 3 dy
    # taps each (static lane-offset slices; same XLU cost as pltpu.roll).
    xs = [xw[:, d * cin:d * cin + wc] for d in range(3)]

    # Depthwise 3x3: 9 shifted FMAs; accumulator seeded by tap 0.
    acc = xs[0][0:th] * dwl[0]
    for k in range(1, 9):
        dy, dx = divmod(k, 3)
        acc = acc + xs[dx][dy:dy + th] * dwl[k]

    # Folded BN1 bias + ReLU in f32, then one cast to the MXU operand dtype.
    h = jnp.maximum(acc.astype(jnp.float32) + b1l_ref[0], 0.0)
    h = h.astype(pwk_ref.dtype)

    # Pointwise 1x1 conv as a block-diagonal matmul in the lane-dense layout:
    # (TH, TW*Cin) @ (TW*Cin, TW*Coutp) per chunk of TW output columns.
    kc = tw * cin
    nc = pwk_ref.shape[1]
    pwk = pwk_ref[...]
    s2 = s2k_ref[0]
    b2 = b2k_ref[0]
    for t in range(w // tw):
        lhs = h[:, t * kc:(t + 1) * kc]
        y = jnp.dot(lhs, pwk, preferred_element_type=jnp.float32)
        y = jnp.maximum(y * s2 + b2, 0.0)            # BN2 scale/bias + ReLU (f32)
        out_ref[:, t * nc:(t + 1) * nc] = y.astype(out_ref.dtype)


@functools.partial(jax.jit, static_argnames=("mxu_dtype", "dw_dtype"))
def dsconv_pallas(x_nchw, dw_w, dw_b, bn1, pw_w, pw_b, bn2, eps=1e-5,
                  mxu_dtype=jnp.bfloat16, dw_dtype=jnp.float32):
    """x_nchw: (N, Cin, H, W); params as in the PyTorch module (inference BN)."""
    N, Cin, H, W = x_nchw.shape
    Cout = pw_w.shape[0]

    g1, be1, m1, v1 = bn1
    g2, be2, m2, v2 = bn2

    # Fold conv biases + inference BN into per-channel scale/bias.  BN1 scale
    # is folded into the f32 depthwise taps (exact); BN2 scale is applied in
    # the f32 epilogue (safer than folding into bf16 pointwise weights).
    s1 = g1 / jnp.sqrt(v1 + eps)                              # (Cin,)
    b1 = (dw_b - m1) * s1 + be1                               # (Cin,)
    s2 = g2 / jnp.sqrt(v2 + eps)                              # (Cout,)
    b2 = (pw_b - m2) * s2 + be2                               # (Cout,)

    Coutp = _round_up(Cout, _LANE)                            # lane-dense output
    Wc = W * Cin
    Lw = (W + 2) * Cin

    # Depthwise taps as lane vectors: dwl[k, x*Cin + c] = s1[c] * w[c, ky, kx].
    dw9 = (jnp.transpose(dw_w[:, 0, :, :], (1, 2, 0)) * s1).reshape(9, Cin)
    dwl = jnp.tile(dw9, (1, W))                               # (9, Wc)
    b1l = jnp.tile(b1, W).reshape(1, Wc)                      # (1, Wc)

    # Pointwise weight as a block-diagonal (kron) matrix over TW columns so the
    # MXU consumes the lane-dense depthwise output with no relayout.
    TW = max(1, min(W, _LANE // max(Cin, 1)))
    while TW > 1 and (W % TW != 0 or TW * Cin * TW * Coutp * 4 > 4 * 1024 * 1024):
        TW -= 1
    pw = jnp.transpose(pw_w[:, :, 0, 0], (1, 0))              # (Cin, Cout)
    pw_p = jnp.pad(pw, ((0, 0), (0, Coutp - Cout)))           # (Cin, Coutp)
    pwk = jnp.kron(jnp.eye(TW, dtype=pw_p.dtype), pw_p).astype(mxu_dtype)
    s2k = jnp.tile(jnp.pad(s2, (0, Coutp - Cout)), TW).reshape(1, TW * Coutp)
    b2k = jnp.tile(jnp.pad(b2, (0, Coutp - Cout)), TW).reshape(1, TW * Coutp)

    # Row tiling from the true padded VMEM footprint + generation-aware limit.
    vmem_limit = _vmem_limit_bytes()
    TH = _pick_tile_h(H, W, Cin, Coutp, TW,
                      x_nchw.dtype.itemsize,
                      jnp.dtype(mxu_dtype).itemsize,
                      jnp.dtype(dw_dtype).itemsize,
                      int(vmem_limit * 0.7))
    H_eff = _round_up(H, TH)
    nH = H_eff // TH

    # NCHW -> NHWC, single fused pad (1-row top halo; bottom halo + tile
    # alignment + 6 spare rows so the 8-row halo block stays in bounds; 1-col
    # left/right halo), then a free reshape to the lane-dense (x, c) layout.
    x_nhwc = jnp.transpose(x_nchw, (0, 2, 3, 1))
    x_pad = jnp.pad(x_nhwc, ((0, 0), (1, H_eff - H + 7), (1, 1), (0, 0)))
    x_flat = x_pad.reshape(N, H_eff + 8, Lw)

    kernel = functools.partial(_dsconv_kernel, cin=Cin, w=W, tw=TW,
                               dw_dtype=dw_dtype)

    out_flat = pl.pallas_call(
        kernel,
        out_shape=jax.ShapeDtypeStruct((N, H_eff, W * Coutp), x_nchw.dtype),
        grid_spec=pltpu.PrefetchScalarGridSpec(
            num_scalar_prefetch=0,
            grid=(N, nH),
            in_specs=[
                # main TH rows of the padded input
                pl.BlockSpec((pl.Squeezed(), TH, Lw), lambda n, r: (n, r, 0)),
                # 8-row bottom-halo view of the same array (first 2 rows used);
                # 8-row blocks keep the sublane dim aligned.
                pl.BlockSpec((pl.Squeezed(), 8, Lw),
                             lambda n, r: (n, r * (TH // 8) + TH // 8, 0)),
                pl.BlockSpec((9, Wc), lambda n, r: (0, 0)),
                pl.BlockSpec((1, Wc), lambda n, r: (0, 0)),
                pl.BlockSpec((TW * Cin, TW * Coutp), lambda n, r: (0, 0)),
                pl.BlockSpec((1, TW * Coutp), lambda n, r: (0, 0)),
                pl.BlockSpec((1, TW * Coutp), lambda n, r: (0, 0)),
            ],
            out_specs=pl.BlockSpec((pl.Squeezed(), TH, W * Coutp),
                                   lambda n, r: (n, r, 0)),
        ),
        compiler_params=pltpu.CompilerParams(
            dimension_semantics=("parallel", "parallel"),
            vmem_limit_bytes=vmem_limit,
        ),
    )(x_flat, x_flat, dwl, b1l, pwk, s2k, b2k)

    # Drop row/channel padding and return to NCHW for the PyTorch contract.
    out = out_flat.reshape(N, H_eff, W, Coutp)[:, :H, :, :Cout]
    return jnp.transpose(out, (0, 3, 1, 2))


def dsconv_reference(x_nchw, dw_w, dw_b, bn1, pw_w, pw_b, bn2, eps=1e-5):
    """Plain-JAX reference (lax conv, NCHW) for correctness checking."""
    Cin = x_nchw.shape[1]
    g1, be1, m1, v1 = bn1
    g2, be2, m2, v2 = bn2

    h = jax.lax.conv_general_dilated(
        x_nchw, dw_w, window_strides=(1, 1), padding=((1, 1), (1, 1)),
        dimension_numbers=("NCHW", "OIHW", "NCHW"), feature_group_count=Cin)
    h = h + dw_b[None, :, None, None]
    h = (h - m1[None, :, None, None]) / jnp.sqrt(v1[None, :, None, None] + eps)
    h = h * g1[None, :, None, None] + be1[None, :, None, None]
    h = jnp.maximum(h, 0.0)

    y = jax.lax.conv_general_dilated(
        h, pw_w, window_strides=(1, 1), padding=((0, 0), (0, 0)),
        dimension_numbers=("NCHW", "OIHW", "NCHW"))
    y = y + pw_b[None, :, None, None]
    y = (y - m2[None, :, None, None]) / jnp.sqrt(v2[None, :, None, None] + eps)
    y = y * g2[None, :, None, None] + be2[None, :, None, None]
    return jnp.maximum(y, 0.0)


if __name__ == "__main__":
    N, Cin, Cout, H, W = 2, 4, 8, 16, 16

    key = jax.random.PRNGKey(0)
    ks = jax.random.split(key, 10)

    x = jax.random.normal(ks[0], (N, Cin, H, W), jnp.float32)

    # Depthwise conv params: weight (Cin, 1, 3, 3), bias (Cin,)
    dw_w = jax.random.normal(ks[1], (Cin, 1, 3, 3), jnp.float32) * 0.2
    dw_b = jax.random.normal(ks[2], (Cin,), jnp.float32) * 0.1
    bn1 = (1.0 + 0.1 * jax.random.normal(ks[3], (Cin,), jnp.float32),           # gamma
           0.1 * jax.random.normal(ks[4], (Cin,), jnp.float32),                 # beta
           0.05 * jax.random.normal(ks[5], (Cin,), jnp.float32),                # running_mean
           1.0 + 0.1 * jnp.abs(jax.random.normal(ks[6], (Cin,), jnp.float32)))  # running_var

    # Pointwise conv params: weight (Cout, Cin, 1, 1), bias (Cout,)
    pw_w = jax.random.normal(ks[7], (Cout, Cin, 1, 1), jnp.float32) * 0.2
    pw_b = jax.random.normal(ks[8], (Cout,), jnp.float32) * 0.1
    k9 = jax.random.split(ks[9], 4)
    bn2 = (1.0 + 0.1 * jax.random.normal(k9[0], (Cout,), jnp.float32),
           0.1 * jax.random.normal(k9[1], (Cout,), jnp.float32),
           0.05 * jax.random.normal(k9[2], (Cout,), jnp.float32),
           1.0 + 0.1 * jnp.abs(jax.random.normal(k9[3], (Cout,), jnp.float32)))

    ref = dsconv_reference(x, dw_w, dw_b, bn1, pw_w, pw_b, bn2)

    # Exact path (f32 MXU operands): tight tolerance.
    out_f32 = dsconv_pallas(x, dw_w, dw_b, bn1, pw_w, pw_b, bn2,
                            mxu_dtype=jnp.float32)
    out_f32 = jax.block_until_ready(out_f32)
    assert out_f32.shape == (N, Cout, H, W)
    assert jnp.allclose(out_f32, ref, atol=1e-4, rtol=1e-4), "f32 path mismatch"

    # Default fast path (bf16 MXU operands, f32 accumulation/epilogue).
    out_bf16 = dsconv_pallas(x, dw_w, dw_b, bn1, pw_w, pw_b, bn2,
                             mxu_dtype=jnp.bfloat16)
    out_bf16 = jax.block_until_ready(out_bf16)
    assert out_bf16.shape == (N, Cout, H, W)
    assert jnp.allclose(out_bf16, ref, atol=5e-2, rtol=5e-2), "bf16 path mismatch"

    print("KERNEL_OK")
</pallas_src>

<mosaic_0001>
module attributes {stable_mosaic.version = 11 : i64} {
  func.func @_dsconv_kernel(%arg0: i32, %arg1: i32, %arg2: memref<1x8x72xf32, #tpu.memory_space<vmem>>, %arg3: memref<1x8x72xf32, #tpu.memory_space<vmem>>, %arg4: memref<9x64xf32, #tpu.memory_space<vmem>>, %arg5: memref<1x64xf32, #tpu.memory_space<vmem>>, %arg6: memref<64x2048xf32, #tpu.memory_space<vmem>>, %arg7: memref<1x2048xf32, #tpu.memory_space<vmem>>, %arg8: memref<1x2048xf32, #tpu.memory_space<vmem>>, %arg9: memref<1x8x2048xf32, #tpu.memory_space<vmem>>) attributes {dimension_semantics = [#tpu.dimension_semantics<parallel>, #tpu.dimension_semantics<parallel>], iteration_bounds = array<i64: 2, 2>, scalar_prefetch = 0 : i64, scratch_operands = 0 : i64, tpu.core_type = #tpu.core_type<tc>, window_params = [{transform_indices = @transform_0, window_bounds = array<i64: 1, 8, 72>}, {transform_indices = @transform_1, window_bounds = array<i64: 1, 8, 72>}, {pipeline_mode = #tpu.pipeline_mode<synchronous>, transform_indices = @transform_2, window_bounds = array<i64: 9, 64>}, {pipeline_mode = #tpu.pipeline_mode<synchronous>, transform_indices = @transform_3, window_bounds = array<i64: 1, 64>}, {pipeline_mode = #tpu.pipeline_mode<synchronous>, transform_indices = @transform_4, window_bounds = array<i64: 64, 2048>}, {pipeline_mode = #tpu.pipeline_mode<synchronous>, transform_indices = @transform_5, window_bounds = array<i64: 1, 2048>}, {pipeline_mode = #tpu.pipeline_mode<synchronous>, transform_indices = @transform_6, window_bounds = array<i64: 1, 2048>}, {transform_indices = @transform_7, window_bounds = array<i64: 1, 8, 2048>}]} {
    %c0 = arith.constant 0 : index
    %c0_0 = arith.constant 0 : index
    %c0_1 = arith.constant 0 : index
    %0 = vector.load %arg2[%c0, %c0_0, %c0_1] : memref<1x8x72xf32, #tpu.memory_space<vmem>>, vector<1x8x72xf32>
    %1 = vector.shape_cast %0 : vector<1x8x72xf32> to vector<8x72xf32>
    %c0_2 = arith.constant 0 : index
    %c0_3 = arith.constant 0 : index
    %c0_4 = arith.constant 0 : index
    %2 = vector.load %arg3[%c0_2, %c0_3, %c0_4] : memref<1x8x72xf32, #tpu.memory_space<vmem>>, vector<1x2x72xf32>
    %3 = vector.shape_cast %2 : vector<1x2x72xf32> to vector<2x72xf32>
    %4 = tpu.concatenate %1, %3 in 0 : vector<8x72xf32>, vector<2x72xf32> -> vector<10x72xf32>
    %c0_5 = arith.constant 0 : index
    %c0_6 = arith.constant 0 : index
    %5 = vector.load %arg4[%c0_5, %c0_6] : memref<9x64xf32, #tpu.memory_space<vmem>>, vector<9x64xf32>
    %6 = vector.extract_strided_slice %4 {offsets = [0, 0], sizes = [10, 64], strides = [1, 1]} : vector<10x72xf32> to vector<10x64xf32>
    %7 = vector.extract_strided_slice %4 {offsets = [0, 4], sizes = [10, 64], strides = [1, 1]} : vector<10x72xf32> to vector<10x64xf32>
    %8 = vector.extract_strided_slice %4 {offsets = [0, 8], sizes = [10, 64], strides = [1, 1]} : vector<10x72xf32> to vector<10x64xf32>
    %9 = vector.extract_strided_slice %6 {offsets = [0, 0], sizes = [8, 64], strides = [1, 1]} : vector<10x64xf32> to vector<8x64xf32>
    %10 = vector.extract_strided_slice %5 {offsets = [0, 0], sizes = [1, 64], strides = [1, 1]} : vector<9x64xf32> to vector<1x64xf32>
    %11 = vector.shape_cast %10 : vector<1x64xf32> to vector<64xf32>
    %12 = vector.shape_cast %11 : vector<64xf32> to vector<1x64xf32>
    %13 = vector.broadcast %12 : vector<1x64xf32> to vector<8x64xf32>
    %14 = arith.mulf %9, %13 : vector<8x64xf32>
    %15 = vector.extract_strided_slice %7 {offsets = [0, 0], sizes = [8, 64], strides = [1, 1]} : vector<10x64xf32> to vector<8x64xf32>
    %16 = vector.extract_strided_slice %5 {offsets = [1, 0], sizes = [1, 64], strides = [1, 1]} : vector<9x64xf32> to vector<1x64xf32>
    %17 = vector.shape_cast %16 : vector<1x64xf32> to vector<64xf32>
    %18 = vector.shape_cast %17 : vector<64xf32> to vector<1x64xf32>
    %19 = vector.broadcast %18 : vector<1x64xf32> to vector<8x64xf32>
    %20 = arith.mulf %15, %19 : vector<8x64xf32>
    %21 = arith.addf %14, %20 : vector<8x64xf32>
    %22 = vector.extract_strided_slice %8 {offsets = [0, 0], sizes = [8, 64], strides = [1, 1]} : vector<10x64xf32> to vector<8x64xf32>
    %23 = vector.extract_strided_slice %5 {offsets = [2, 0], sizes = [1, 64], strides = [1, 1]} : vector<9x64xf32> to vector<1x64xf32>
    %24 = vector.shape_cast %23 : vector<1x64xf32> to vector<64xf32>
    %25 = vector.shape_cast %24 : vector<64xf32> to vector<1x64xf32>
    %26 = vector.broadcast %25 : vector<1x64xf32> to vector<8x64xf32>
    %27 = arith.mulf %22, %26 : vector<8x64xf32>
    %28 = arith.addf %21, %27 : vector<8x64xf32>
    %29 = vector.extract_strided_slice %6 {offsets = [1, 0], sizes = [8, 64], strides = [1, 1]} : vector<10x64xf32> to vector<8x64xf32>
    %30 = vector.extract_strided_slice %5 {offsets = [3, 0], sizes = [1, 64], strides = [1, 1]} : vector<9x64xf32> to vector<1x64xf32>
    %31 = vector.shape_cast %30 : vector<1x64xf32> to vector<64xf32>
    %32 = vector.shape_cast %31 : vector<64xf32> to vector<1x64xf32>
    %33 = vector.broadcast %32 : vector<1x64xf32> to vector<8x64xf32>
    %34 = arith.mulf %29, %33 : vector<8x64xf32>
    %35 = arith.addf %28, %34 : vector<8x64xf32>
    %36 = vector.extract_strided_slice %7 {offsets = [1, 0], sizes = [8, 64], strides = [1, 1]} : vector<10x64xf32> to vector<8x64xf32>
    %37 = vector.extract_strided_slice %5 {offsets = [4, 0], sizes = [1, 64], strides = [1, 1]} : vector<9x64xf32> to vector<1x64xf32>
    %38 = vector.shape_cast %37 : vector<1x64xf32> to vector<64xf32>
    %39 = vector.shape_cast %38 : vector<64xf32> to vector<1x64xf32>
    %40 = vector.broadcast %39 : vector<1x64xf32> to vector<8x64xf32>
    %41 = arith.mulf %36, %40 : vector<8x64xf32>
    %42 = arith.addf %35, %41 : vector<8x64xf32>
    %43 = vector.extract_strided_slice %8 {offsets = [1, 0], sizes = [8, 64], strides = [1, 1]} : vector<10x64xf32> to vector<8x64xf32>
    %44 = vector.extract_strided_slice %5 {offsets = [5, 0], sizes = [1, 64], strides = [1, 1]} : vector<9x64xf32> to vector<1x64xf32>
    %45 = vector.shape_cast %44 : vector<1x64xf32> to vector<64xf32>
    %46 = vector.shape_cast %45 : vector<64xf32> to vector<1x64xf32>
    %47 = vector.broadcast %46 : vector<1x64xf32> to vector<8x64xf32>
    %48 = arith.mulf %43, %47 : vector<8x64xf32>
    %49 = arith.addf %42, %48 : vector<8x64xf32>
    %50 = vector.extract_strided_slice %6 {offsets = [2, 0], sizes = [8, 64], strides = [1, 1]} : vector<10x64xf32> to vector<8x64xf32>
    %51 = vector.extract_strided_slice %5 {offsets = [6, 0], sizes = [1, 64], strides = [1, 1]} : vector<9x64xf32> to vector<1x64xf32>
    %52 = vector.shape_cast %51 : vector<1x64xf32> to vector<64xf32>
    %53 = vector.shape_cast %52 : vector<64xf32> to vector<1x64xf32>
    %54 = vector.broadcast %53 : vector<1x64xf32> to vector<8x64xf32>
    %55 = arith.mulf %50, %54 : vector<8x64xf32>
    %56 = arith.addf %49, %55 : vector<8x64xf32>
    %57 = vector.extract_strided_slice %7 {offsets = [2, 0], sizes = [8, 64], strides = [1, 1]} : vector<10x64xf32> to vector<8x64xf32>
    %58 = vector.extract_strided_slice %5 {offsets = [7, 0], sizes = [1, 64], strides = [1, 1]} : vector<9x64xf32> to vector<1x64xf32>
    %59 = vector.shape_cast %58 : vector<1x64xf32> to vector<64xf32>
    %60 = vector.shape_cast %59 : vector<64xf32> to vector<1x64xf32>
    %61 = vector.broadcast %60 : vector<1x64xf32> to vector<8x64xf32>
    %62 = arith.mulf %57, %61 : vector<8x64xf32>
    %63 = arith.addf %56, %62 : vector<8x64xf32>
    %64 = vector.extract_strided_slice %8 {offsets = [2, 0], sizes = [8, 64], strides = [1, 1]} : vector<10x64xf32> to vector<8x64xf32>
    %65 = vector.extract_strided_slice %5 {offsets = [8, 0], sizes = [1, 64], strides = [1, 1]} : vector<9x64xf32> to vector<1x64xf32>
    %66 = vector.shape_cast %65 : vector<1x64xf32> to vector<64xf32>
    %67 = vector.shape_cast %66 : vector<64xf32> to vector<1x64xf32>
    %68 = vector.broadcast %67 : vector<1x64xf32> to vector<8x64xf32>
    %69 = arith.mulf %64, %68 : vector<8x64xf32>
    %70 = arith.addf %63, %69 : vector<8x64xf32>
    %c0_7 = arith.constant 0 : index
    %c0_8 = arith.constant 0 : index
    %71 = vector.load %arg5[%c0_7, %c0_8] : memref<1x64xf32, #tpu.memory_space<vmem>>, vector<1x64xf32>
    %72 = vector.shape_cast %71 : vector<1x64xf32> to vector<64xf32>
    %73 = vector.shape_cast %72 : vector<64xf32> to vector<1x64xf32>
    %74 = vector.broadcast %73 : vector<1x64xf32> to vector<8x64xf32>
    %75 = arith.addf %70, %74 : vector<8x64xf32>
    %cst = arith.constant 0.000000e+00 : f32
    %76 = vector.broadcast %cst : f32 to vector<8x64xf32>
    %77 = arith.maximumf %75, %76 : vector<8x64xf32>
    %c0_9 = arith.constant 0 : index
    %c0_10 = arith.constant 0 : index
    %78 = vector.load %arg6[%c0_9, %c0_10] : memref<64x2048xf32, #tpu.memory_space<vmem>>, vector<64x2048xf32>
    %c0_11 = arith.constant 0 : index
    %c0_12 = arith.constant 0 : index
    %79 = vector.load %arg7[%c0_11, %c0_12] : memref<1x2048xf32, #tpu.memory_space<vmem>>, vector<1x2048xf32>
    %80 = vector.shape_cast %79 : vector<1x2048xf32> to vector<2048xf32>
    %c0_13 = arith.constant 0 : index
    %c0_14 = arith.constant 0 : index
    %81 = vector.load %arg8[%c0_13, %c0_14] : memref<1x2048xf32, #tpu.memory_space<vmem>>, vector<1x2048xf32>
    %82 = vector.shape_cast %81 : vector<1x2048xf32> to vector<2048xf32>
    %cst_15 = arith.constant dense<0.000000e+00> : vector<8x2048xf32>
    %83 = tpu.matmul %77, %78, %cst_15 {dimension_numbers = #tpu.dot_dimension_numbers<[1], [0], [0], [1], [0, 0, 1, 1], [], []>} : vector<8x64xf32>, vector<64x2048xf32>, vector<8x2048xf32> -> vector<8x2048xf32>
    %84 = vector.shape_cast %80 : vector<2048xf32> to vector<1x2048xf32>
    %85 = vector.broadcast %84 : vector<1x2048xf32> to vector<8x2048xf32>
    %86 = arith.mulf %83, %85 : vector<8x2048xf32>
    %87 = vector.shape_cast %82 : vector<2048xf32> to vector<1x2048xf32>
    %88 = vector.broadcast %87 : vector<1x2048xf32> to vector<8x2048xf32>
    %89 = arith.addf %86, %88 : vector<8x2048xf32>
    %cst_16 = arith.constant 0.000000e+00 : f32
    %90 = vector.broadcast %cst_16 : f32 to vector<8x2048xf32>
    %91 = arith.maximumf %89, %90 : vector<8x2048xf32>
    %c0_17 = arith.constant 0 : index
    %c0_18 = arith.constant 0 : index
    %c0_19 = arith.constant 0 : index
    %92 = vector.load %arg9[%c0_17, %c0_18, %c0_19] : memref<1x8x2048xf32, #tpu.memory_space<vmem>>, vector<1x8x2048xf32>
    %93 = vector.shape_cast %92 : vector<1x8x2048xf32> to vector<8x2048xf32>
    %94 = vector.shape_cast %91 : vector<8x2048xf32> to vector<1x8x2048xf32>
    tpu.vector_store %arg9[%c0_17, %c0_18, %c0_19], %94 {strides = array<i32>} : memref<1x8x2048xf32, #tpu.memory_space<vmem>>, vector<1x8x2048xf32>,
    return
  }
  func.func @transform_0(%arg0: i32, %arg1: i32) -> (i32, i32, i32) {
    %c0_i32 = arith.constant 0 : i32
    %c0_i32_0 = arith.constant 0 : i32
    return %arg0, %arg1, %c0_i32 : i32, i32, i32
  }
  func.func @transform_1(%arg0: i32, %arg1: i32) -> (i32, i32, i32) {
    %c1_i32 = arith.constant 1 : i32
    %0 = arith.muli %arg1, %c1_i32 : i32
    %c1_i32_0 = arith.constant 1 : i32
    %1 = arith.addi %0, %c1_i32_0 : i32
    %c0_i32 = arith.constant 0 : i32
    %c0_i32_1 = arith.constant 0 : i32
    return %arg0, %1, %c0_i32 : i32, i32, i32
  }
  func.func @transform_2(%arg0: i32, %arg1: i32) -> (i32, i32) {
    %c0_i32 = arith.constant 0 : i32
    %c0_i32_0 = arith.constant 0 : i32
    %c0_i32_1 = arith.constant 0 : i32
    return %c0_i32, %c0_i32_0 : i32, i32
  }
  func.func @transform_3(%arg0: i32, %arg1: i32) -> (i32, i32) {
    %c0_i32 = arith.constant 0 : i32
    %c0_i32_0 = arith.constant 0 : i32
    %c0_i32_1 = arith.constant 0 : i32
    return %c0_i32, %c0_i32_0 : i32, i32
  }
  func.func @transform_4(%arg0: i32, %arg1: i32) -> (i32, i32) {
    %c0_i32 = arith.constant 0 : i32
    %c0_i32_0 = arith.constant 0 : i32
    %c0_i32_1 = arith.constant 0 : i32
    return %c0_i32, %c0_i32_0 : i32, i32
  }
  func.func @transform_5(%arg0: i32, %arg1: i32) -> (i32, i32) {
    %c0_i32 = arith.constant 0 : i32
    %c0_i32_0 = arith.constant 0 : i32
    %c0_i32_1 = arith.constant 0 : i32
    return %c0_i32, %c0_i32_0 : i32, i32
  }
  func.func @transform_6(%arg0: i32, %arg1: i32) -> (i32, i32) {
    %c0_i32 = arith.constant 0 : i32
    %c0_i32_0 = arith.constant 0 : i32
    %c0_i32_1 = arith.constant 0 : i32
    return %c0_i32, %c0_i32_0 : i32, i32
  }
  func.func @transform_7(%arg0: i32, %arg1: i32) -> (i32, i32, i32) {
    %c0_i32 = arith.constant 0 : i32
    %c0_i32_0 = arith.constant 0 : i32
    return %arg0, %arg1, %c0_i32 : i32, i32, i32
  }
}

</mosaic_0001>

<llo_original>
// kernel: tile.31
$region0: #{tile.31}
  #allocation0 [shape = 's32[1]{0}', space=sflag, size = 0x4, scoped, tag = 'scoped memory for tile.31']
  %s0 = inlined_call_operand.vmem [shape: f32[128], index: 0, kind: input, shape index: {}]
  %s1 = inlined_call_operand.vmem [shape: f32[16,128], index: 1, kind: output, shape index: {}]
  // Predicated region
  $region2: #{tile.31} parent=0 // pred_check
    _
  $region3: #{tile.31} parent=0 // pred_check_branch
    %3 = sbr.rel (0) target = $region5
  $region4: #{tile.31} parent=0 // pred_region
    _
  $region5: #{tile.31} parent=0 // pred_fallthru
    _
  %v4 = vld [vmem:[%s0] ss:$0 sm:$0xff]
  %5 = vst [vmem:[%s1] sm:$0xff] %v4
  %s6 = scalar_lea.vmem %s1, 8
  %7 = vst [vmem:[%s6] sm:$0xff] %v4

// kernel: tile.26
$region0: #{tile.26}
  #allocation0 [shape = 's32[1]{0}', space=sflag, size = 0x4, scoped, tag = 'scoped memory for tile.26']
  %s0 = inlined_call_operand.vmem [shape: f32[4], index: 0, kind: input, shape index: {}]
  %s1 = inlined_call_operand.vmem [shape: f32[16,4], index: 1, kind: output, shape index: {}]
  // Predicated region
  $region2: #{tile.26} parent=0 // pred_check
    _
  $region3: #{tile.26} parent=0 // pred_check_branch
    %3 = sbr.rel (0) target = $region5
  $region4: #{tile.26} parent=0 // pred_region
    _
  $region5: #{tile.26} parent=0 // pred_fallthru
    _
  %v4 = vld [vmem:[%s0] ss:$0 sm:$0xff]
  %5 = vst [vmem:[%s1] sm:$0xff] %v4
  %s6 = scalar_lea.vmem %s1, 8
  %7 = vst [vmem:[%s6] sm:$0xff] %v4

// kernel: tile.27
$region0: #{tile.27}
  %s0 = inlined_call_operand.vmem [shape: f32[16,4], index: 0, kind: input, shape index: {}]
  %s1 = inlined_call_operand.vmem [shape: f32[1,64], index: 1, kind: output, shape index: {}]
  $region1: #{tile.27} parent=0
    #allocation0 [shape = 'u8[4096]{0}', space=vmem, size = 0x1000, scoped, tag = 'scoped mem for output reshape']
    %v2 = vld [vmem:[%s0] sm:$0x1]
    %vm3 = vcmask 31744
    %4 = vst.msk [vmem:[#allocation0] sm:$0x1] %vm3, %v2
    %s5 = scalar_lea.vmem %s0, 15
    %v6 = vld [vmem:[%s5] sm:$0x1]
    %7 = vrot.lane.b32.xlu0 %v6, 60
    %v8 = vpop.permute.xlu0 %7
    %vm9 = vcmask 523744
    %10 = vst.msk [vmem:[#allocation0] sm:$0x1] %vm9, %v8
    %s11 = scalar_lea.vmem %s0, 14
    %v12 = vld [vmem:[%s11] sm:$0x1]
    %13 = vrot.lane.b32.xlu0 %v12, 56
    %v14 = vpop.permute.xlu0 %13
    %vm15 = vcmask 490944
    %16 = vst.msk [vmem:[#allocation0] sm:$0x1] %vm15, %v14
    %s17 = scalar_lea.vmem %s0, 13
    %v18 = vld [vmem:[%s17] sm:$0x1]
    %19 = vrot.lane.b32.xlu0 %v18, 52
    %v20 = vpop.permute.xlu0 %19
    %vm21 = vcmask 458144
    %22 = vst.msk [vmem:[#allocation0] sm:$0x1] %vm21, %v20
    %s23 = scalar_lea.vmem %s0, 12
    %v24 = vld [vmem:[%s23] sm:$0x1]
    %25 = vrot.lane.b32.xlu0 %v24, 48
    %v26 = vpop.permute.xlu0 %25
    %vm27 = vcmask 425344
    %28 = vst.msk [vmem:[#allocation0] sm:$0x1] %vm27, %v26
    %s29 = scalar_lea.vmem %s0, 11
    %v30 = vld [vmem:[%s29] sm:$0x1]
    %31 = vrot.lane.b32.xlu0 %v30, 44
    %v32 = vpop.permute.xlu0 %31
    %vm33 = vcmask 392544
    %34 = vst.msk [vmem:[#allocation0] sm:$0x1] %vm33, %v32
    %s35 = scalar_lea.vmem %s0, 10
    %v36 = vld [vmem:[%s35] sm:$0x1]
    %37 = vrot.lane.b32.xlu0 %v36, 40
    %v38 = vpop.permute.xlu0 %37
    %vm39 = vcmask 359744
    %40 = vst.msk [vmem:[#allocation0] sm:$0x1] %vm39, %v38
    %s41 = scalar_lea.vmem %s0, 9
    %v42 = vld [vmem:[%s41] sm:$0x1]
    %43 = vrot.lane.b32.xlu0 %v42, 36
    %v44 = vpop.permute.xlu0 %43
    %vm45 = vcmask 326944
    %46 = vst.msk [vmem:[#allocation0] sm:$0x1] %vm45, %v44
    %s47 = scalar_lea.vmem %s0, 8
    %v48 = vld [vmem:[%s47] sm:$0x1]
    %49 = vrot.lane.b32.xlu0 %v48, 32
    %v50 = vpop.permute.xlu0 %49
    %vm51 = vcmask 294144
    %52 = vst.msk [vmem:[#allocation0] sm:$0x1] %vm51, %v50
    %s53 = scalar_lea.vmem %s0, 7
    %v54 = vld [vmem:[%s53] sm:$0x1]
    %55 = vrot.lane.b32.xlu0 %v54, 28
    %v56 = vpop.permute.xlu0 %55
    %vm57 = vcmask 261344
    %58 = vst.msk [vmem:[#allocation0] sm:$0x1] %vm57, %v56
    %s59 = scalar_lea.vmem %s0, 6
    %v60 = vld [vmem:[%s59] sm:$0x1]
    %61 = vrot.lane.b32.xlu0 %v60, 24
    %v62 = vpop.permute.xlu0 %61
    %vm63 = vcmask 228544
    %64 = vst.msk [vmem:[#allocation0] sm:$0x1] %vm63, %v62
    %s65 = scalar_lea.vmem %s0, 5
    %v66 = vld [vmem:[%s65] sm:$0x1]
    %67 = vrot.lane.b32.xlu0 %v66, 20
    %v68 = vpop.permute.xlu0 %67
    %vm69 = vcmask 195744
    %70 = vst.msk [vmem:[#allocation0] sm:$0x1] %vm69, %v68
    %s71 = scalar_lea.vmem %s0, 4
    %v72 = vld [vmem:[%s71] sm:$0x1]
    %73 = vrot.lane.b32.xlu0 %v72, 16
    %v74 = vpop.permute.xlu0 %73
    %vm75 = vcmask 162944
    %76 = vst.msk [vmem:[#allocation0] sm:$0x1] %vm75, %v74
    %s77 = scalar_lea.vmem %s0, 3
    %v78 = vld [vmem:[%s77] sm:$0x1]
    %79 = vrot.lane.b32.xlu0 %v78, 12
    %v80 = vpop.permute.xlu0 %79
    %vm81 = vcmask 130144
    %82 = vst.msk [vmem:[#allocation0] sm:$0x1] %vm81, %v80
    %s83 = scalar_lea.vmem %s0, 2
    %v84 = vld [vmem:[%s83] sm:$0x1]
    %85 = vrot.lane.b32.xlu0 %v84, 8
    %v86 = vpop.permute.xlu0 %85
    %vm87 = vcmask 97344
    %88 = vst.msk [vmem:[#allocation0] sm:$0x1] %vm87, %v86
    %s89 = scalar_lea.vmem %s0, 1
    %v90 = vld [vmem:[%s89] sm:$0x1]
    %91 = vrot.lane.b32.xlu0 %v90, 4
    %v92 = vpop.permute.xlu0 %91
    %vm93 = vcmask 64544
    %94 = vst.msk [vmem:[#allocation0] sm:$0x1] %vm93, %v92
    %s96 = sshll.u32 1, 1
    %s97 = ssub.s32 %s96, 1
    %v99 = vld [vmem:[#allocation0] sm:%s97]
    %s100 = sshll.u32 1, 1
    %s101 = ssub.s32 %s100, 1
    %102 = vst [vmem:[%s1] sm:%s101] %v99

// kernel: dsconv_pallas.1
$region0: #{dsconv_pallas.1}
  #allocation0 [shape = 'u32[]', space=smem, size = 0x4, offset = 0x4, fixed_abs, tag = 'smem constant byte address 0x4 - core index']
  #allocation1 [shape = 'u32[144,128]{1,0:T(1,128)}', space=vmem, size = 0x12000, scoped, tag = 'internal scratch']
  %s0 = inlined_call_operand.vmem [shape: f32[2,24,72], index: 0, kind: input, shape index: {}, may-alias: {0,1}]
  %s1 = inlined_call_operand.vmem [shape: f32[2,24,72], index: 1, kind: input, shape index: {}, may-alias: {0,1}]
  %s2 = inlined_call_operand.vmem [shape: f32[9,64], index: 2, kind: input, shape index: {}]
  %s3 = inlined_call_operand.vmem [shape: f32[1,64], index: 3, kind: input, shape index: {}]
  %s4 = inlined_call_operand.vmem [shape: f32[64,2048], index: 4, kind: input, shape index: {}]
  %s5 = inlined_call_operand.vmem [shape: f32[1,2048], index: 5, kind: input, shape index: {}]
  %s6 = inlined_call_operand.vmem [shape: f32[1,2048], index: 6, kind: input, shape index: {}]
  %s7 = inlined_call_operand.vmem [shape: f32[2,16,2048], index: 7, kind: output, shape index: {}]
  %s8 = sld [smem:[#allocation0]]
  $region61: #{dsconv_pallas.1} parent=0
    _
  %s10 = ssub.s32 1, %s8
  %s11 = scalar_select 0, %s10, %s8
  loop: start=0, step=1, limit=6
  $region2: #{dsconv_pallas.1} parent=0 // loop_pre_header
    _
  $region3: #{dsconv_pallas.1} parent=0 // loop_header
    %s13 = sphi 0, %s17
    %p14 = scmp.ge.s32.totalorder %s13, 6
    %s20 = sphi 0, %s32
    %s21 = sphi 0, %s28
    %s22 = sphi 0, %s20
    %s23 = sphi 0, %s21
    %s24 = sphi 0, %s22
    %s25 = sphi 0, %s23
    %s37 = sphi 0, %s39
    %s40 = sphi 0, %s37
    %s41 = sphi 0, %s40
    %s57 = sphi 0, %s41
    %s67 = sphi 0, %s69
    %s70 = sphi 0, %s67
    %s71 = sphi 0, %s70
    %s87 = sphi 0, %s71
    %s91 = sphi 0, %s91
    %s93 = sphi 0, %s91
    %s94 = sphi 0, %s93
    %s108 = sphi 0, %s94
    %s112 = sphi 0, %s112
    %s114 = sphi 0, %s112
    %s115 = sphi 0, %s114
    %s129 = sphi 0, %s115
    %s133 = sphi 0, %s133
    %s135 = sphi 0, %s133
    %s136 = sphi 0, %s135
    %s150 = sphi 0, %s136
    %s154 = sphi 0, %s154
    %s156 = sphi 0, %s154
    %s157 = sphi 0, %s156
    %s171 = sphi 0, %s157
    %s175 = sphi 0, %s175
    %s177 = sphi 0, %s175
    %s178 = sphi 0, %s177
    %s192 = sphi 0, %s178
    %s200 = sphi 0, %s202
    %s203 = sphi 0, %s200
    %s204 = sphi 0, %s203
    %s220 = sphi 0, %s204
  $region4: #{dsconv_pallas.1} parent=0 // loop_header_branch
    %16 = sbr.rel (%p14) target = $region8
  $region5: #{dsconv_pallas.1} parent=0 // loop_body
    %s18 = ssub.s32 %s13, 1
    %s19 = ssub.s32 %s13, 2
    %s26 = sadd.s32 1, %s21
    %p27 = scmp.ge.s32.totalorder %s26, 2
    %s28 = scalar_select %p27, 0, %s26
    %s29 = sadd.s32 1, %s20
    %s30 = scalar_select %p27, %s29, %s20
    %p31 = scmp.ge.s32.totalorder %s30, 2
    %s32 = scalar_select %p31, 0, %s30
    %s33 = ssub.s32 %s20, %s32
    %s34 = ssub.s32 %s21, %s28
    %s35 = sor.u32 %s33, %s34
    %p36 = scmp.eq.s32.totalorder %s35, 0
    %s38 = sadd.s32 %s37, 1
    %s39 = scalar_select %p36, %s37, %s38
    %p42 = pneg %p36
    %p43 = scmp.eq.s32.totalorder %s13, 3
    %p44 = por %p42, %p43
    %p45 = scmp.ne.s32.totalorder %s37, %s40
    %p46 = scmp.eq.s32.totalorder %s13, 0
    %p47 = por %p45, %p46
    %p48 = scmp.ne.s32.totalorder %s37, %s40
    %p49 = scmp.eq.s32.totalorder %s18, 3
    %p50 = por %p48, %p49
    %p51 = scmp.ne.s32.totalorder %s40, %s41
    %p52 = scmp.eq.s32.totalorder %s18, 0
    %p53 = por %p51, %p52
    %p54 = scmp.ne.s32.totalorder %s40, %s41
    %p55 = scmp.eq.s32.totalorder %s19, 3
    %p56 = por %p54, %p55
    %p58 = scmp.ne.s32.totalorder %s41, %s57
    %p59 = scmp.eq.s32.totalorder %s19, 0
    %p60 = por %p58, %p59
    %s61 = sadd.s32 %s21, 1
    %s62 = sadd.s32 %s28, 1
    %s63 = ssub.s32 %s20, %s32
    %s64 = ssub.s32 %s61, %s62
    %s65 = sor.u32 %s63, %s64
    %p66 = scmp.eq.s32.totalorder %s65, 0
    %s68 = sadd.s32 %s67, 1
    %s69 = scalar_select %p66, %s67, %s68
    %p72 = pneg %p66
    %p73 = scmp.eq.s32.totalorder %s13, 3
    %p74 = por %p72, %p73
    %p75 = scmp.ne.s32.totalorder %s67, %s70
    %p76 = scmp.eq.s32.totalorder %s13, 0
    %p77 = por %p75, %p76
    %p78 = scmp.ne.s32.totalorder %s67, %s70
    %p79 = scmp.eq.s32.totalorder %s18, 3
    %p80 = por %p78, %p79
    %p81 = scmp.ne.s32.totalorder %s70, %s71
    %p82 = scmp.eq.s32.totalorder %s18, 0
    %p83 = por %p81, %p82
    %p84 = scmp.ne.s32.totalorder %s70, %s71
    %p85 = scmp.eq.s32.totalorder %s19, 3
    %p86 = por %p84, %p85
    %p88 = scmp.ne.s32.totalorder %s71, %s87
    %p89 = scmp.eq.s32.totalorder %s19, 0
    %p90 = por %p88, %p89
    %s92 = sadd.s32 %s91, 1
    %p95 = scmp.eq.s32.totalorder %s13, 3
    %p96 = scmp.ne.s32.totalorder %s91, %s93
    %p97 = scmp.eq.s32.totalorder %s13, 0
    %p98 = por %p96, %p97
    %p99 = scmp.ne.s32.totalorder %s91, %s93
    %p100 = scmp.eq.s32.totalorder %s18, 3
    %p101 = por %p99, %p100
    %p102 = scmp.ne.s32.totalorder %s93, %s94
    %p103 = scmp.eq.s32.totalorder %s18, 0
    %p104 = por %p102, %p103
    %p105 = scmp.ne.s32.totalorder %s93, %s94
    %p106 = scmp.eq.s32.totalorder %s19, 3
    %p107 = por %p105, %p106
    %p109 = scmp.ne.s32.totalorder %s94, %s108
    %p110 = scmp.eq.s32.totalorder %s19, 0
    %p111 = por %p109, %p110
    %s113 = sadd.s32 %s112, 1
    %p116 = scmp.eq.s32.totalorder %s13, 3
    %p117 = scmp.ne.s32.totalorder %s112, %s114
    %p118 = scmp.eq.s32.totalorder %s13, 0
    %p119 = por %p117, %p118
    %p120 = scmp.ne.s32.totalorder %s112, %s114
    %p121 = scmp.eq.s32.totalorder %s18, 3
    %p122 = por %p120, %p121
    %p123 = scmp.ne.s32.totalorder %s114, %s115
    %p124 = scmp.eq.s32.totalorder %s18, 0
    %p125 = por %p123, %p124
    %p126 = scmp.ne.s32.totalorder %s114, %s115
    %p127 = scmp.eq.s32.totalorder %s19, 3
    %p128 = por %p126, %p127
    %p130 = scmp.ne.s32.totalorder %s115, %s129
    %p131 = scmp.eq.s32.totalorder %s19, 0
    %p132 = por %p130, %p131
    %s134 = sadd.s32 %s133, 1
    %p137 = scmp.eq.s32.totalorder %s13, 3
    %p138 = scmp.ne.s32.totalorder %s133, %s135
    %p139 = scmp.eq.s32.totalorder %s13, 0
    %p140 = por %p138, %p139
    %p141 = scmp.ne.s32.totalorder %s133, %s135
    %p142 = scmp.eq.s32.totalorder %s18, 3
    %p143 = por %p141, %p142
    %p144 = scmp.ne.s32.totalorder %s135, %s136
    %p145 = scmp.eq.s32.totalorder %s18, 0
    %p146 = por %p144, %p145
    %p147 = scmp.ne.s32.totalorder %s135, %s136
    %p148 = scmp.eq.s32.totalorder %s19, 3
    %p149 = por %p147, %p148
    %p151 = scmp.ne.s32.totalorder %s136, %s150
    %p152 = scmp.eq.s32.totalorder %s19, 0
    %p153 = por %p151, %p152
    %s155 = sadd.s32 %s154, 1
    %p158 = scmp.eq.s32.totalorder %s13, 3
    %p159 = scmp.ne.s32.totalorder %s154, %s156
    %p160 = scmp.eq.s32.totalorder %s13, 0
    %p161 = por %p159, %p160
    %p162 = scmp.ne.s32.totalorder %s154, %s156
    %p163 = scmp.eq.s32.totalorder %s18, 3
    %p164 = por %p162, %p163
    %p165 = scmp.ne.s32.totalorder %s156, %s157
    %p166 = scmp.eq.s32.totalorder %s18, 0
    %p167 = por %p165, %p166
    %p168 = scmp.ne.s32.totalorder %s156, %s157
    %p169 = scmp.eq.s32.totalorder %s19, 3
    %p170 = por %p168, %p169
    %p172 = scmp.ne.s32.totalorder %s157, %s171
    %p173 = scmp.eq.s32.totalorder %s19, 0
    %p174 = por %p172, %p173
    %s176 = sadd.s32 %s175, 1
    %p179 = scmp.eq.s32.totalorder %s13, 3
    %p180 = scmp.ne.s32.totalorder %s175, %s177
    %p181 = scmp.eq.s32.totalorder %s13, 0
    %p182 = por %p180, %p181
    %p183 = scmp.ne.s32.totalorder %s175, %s177
    %p184 = scmp.eq.s32.totalorder %s18, 3
    %p185 = por %p183, %p184
    %p186 = scmp.ne.s32.totalorder %s177, %s178
    %p187 = scmp.eq.s32.totalorder %s18, 0
    %p188 = por %p186, %p187
    %p189 = scmp.ne.s32.totalorder %s177, %s178
    %p190 = scmp.eq.s32.totalorder %s19, 3
    %p191 = por %p189, %p190
    %p193 = scmp.ne.s32.totalorder %s178, %s192
    %p194 = scmp.eq.s32.totalorder %s19, 0
    %p195 = por %p193, %p194
    %s196 = ssub.s32 %s20, %s32
    %s197 = ssub.s32 %s21, %s28
    %s198 = sor.u32 %s196, %s197
    %p199 = scmp.eq.s32.totalorder %s198, 0
    %s201 = sadd.s32 %s200, 1
    %s202 = scalar_select %p199, %s200, %s201
    %p205 = pneg %p199
    %p206 = scmp.eq.s32.totalorder %s13, 3
    %p207 = por %p205, %p206
    %p208 = scmp.ne.s32.totalorder %s200, %s203
    %p209 = scmp.eq.s32.totalorder %s13, 0
    %p210 = por %p208, %p209
    %p211 = scmp.ne.s32.totalorder %s200, %s203
    %p212 = scmp.eq.s32.totalorder %s18, 3
    %p213 = por %p211, %p212
    %p214 = scmp.ne.s32.totalorder %s203, %s204
    %p215 = scmp.eq.s32.totalorder %s18, 0
    %p216 = por %p214, %p215
    %p217 = scmp.ne.s32.totalorder %s203, %s204
    %p218 = scmp.eq.s32.totalorder %s19, 3
    %p219 = por %p217, %p218
    %p221 = scmp.ne.s32.totalorder %s204, %s220
    %p222 = scmp.eq.s32.totalorder %s19, 0
    %p223 = por %p221, %p222
    %p224 = scmp.le.s32.totalorder 1, %s13
    %p225 = scmp.lt.s32.totalorder %s13, 5
    %p226 = pnand %p224, %p225
    %p227 = pneg %p226
    // Predicated region
    $region9: #{dsconv_pallas.1} parent=5 // pred_check
      _
    $region10: #{dsconv_pallas.1} parent=5 // pred_check_branch
      %229 = sbr.rel (%p226) target = $region12
    $region11: #{dsconv_pallas.1} parent=5 // pred_region
      %s230 = ssub.s32 %s13, 1
      // Predicated region
      $region13: #{dsconv_pallas.1} parent=11 // pred_check
        %p231 = pneg %p104
      $region14: #{dsconv_pallas.1} parent=11 // pred_check_branch
        %233 = sbr.rel (%p231) target = $region16
      $region15: #{dsconv_pallas.1} parent=11 // pred_region
        _
      $region16: #{dsconv_pallas.1} parent=11 // pred_fallthru
        _
      // Predicated region
      $region17: #{dsconv_pallas.1} parent=11 // pred_check
        %p234 = pneg %p125
      $region18: #{dsconv_pallas.1} parent=11 // pred_check_branch
        %236 = sbr.rel (%p234) target = $region20
      $region19: #{dsconv_pallas.1} parent=11 // pred_region
        _
      $region20: #{dsconv_pallas.1} parent=11 // pred_fallthru
        _
      // Predicated region
      $region21: #{dsconv_pallas.1} parent=11 // pred_check
        %p237 = pneg %p146
      $region22: #{dsconv_pallas.1} parent=11 // pred_check_branch
        %239 = sbr.rel (%p237) target = $region24
      $region23: #{dsconv_pallas.1} parent=11 // pred_region
        _
      $region24: #{dsconv_pallas.1} parent=11 // pred_fallthru
        _
      // Predicated region
      $region25: #{dsconv_pallas.1} parent=11 // pred_check
        %p240 = pneg %p167
      $region26: #{dsconv_pallas.1} parent=11 // pred_check_branch
        %242 = sbr.rel (%p240) target = $region28
      $region27: #{dsconv_pallas.1} parent=11 // pred_region
        _
      $region28: #{dsconv_pallas.1} parent=11 // pred_fallthru
        _
      // Predicated region
      $region29: #{dsconv_pallas.1} parent=11 // pred_check
        %p243 = pneg %p188
      $region30: #{dsconv_pallas.1} parent=11 // pred_check_branch
        %245 = sbr.rel (%p243) target = $region32
      $region31: #{dsconv_pallas.1} parent=11 // pred_region
        _
      $region32: #{dsconv_pallas.1} parent=11 // pred_fallthru
        _
    $region12: #{dsconv_pallas.1} parent=5 // pred_fallthru
      _
    %p246 = scmp.lt.s32.totalorder %s13, 4
    // Predicated region
    $region33: #{dsconv_pallas.1} parent=5 // pred_check
      %p247 = pneg %p246
    $region34: #{dsconv_pallas.1} parent=5 // pred_check_branch
      %249 = sbr.rel (%p247) target = $region36
    $region35: #{dsconv_pallas.1} parent=5 // pred_region
      // Predicated region
      $region37: #{dsconv_pallas.1} parent=35 // pred_check
        %p250 = pneg %p47
      $region38: #{dsconv_pallas.1} parent=35 // pred_check_branch
        %252 = sbr.rel (%p250) target = $region40
      $region39: #{dsconv_pallas.1} parent=35 // pred_region
        %p253 = scmp.lt.s32.totalorder %s20, 1
        %s254 = scalar_select %p253, %s20, 1
        %p255 = scmp.lt.s32.totalorder %s21, 2
        %s256 = scalar_select %p255, %s21, 2
        %s257 = smul.addr %s254, 3
        %s258 = sadd.s32 %s256, %s257
        %s259 = smul.addr %s258, 8
        %s260 = scalar_lea.vmem %s0, %s259
      $region40: #{dsconv_pallas.1} parent=35 // pred_fallthru
        _
      // Predicated region
      $region41: #{dsconv_pallas.1} parent=35 // pred_check
        %p261 = pneg %p77
      $region42: #{dsconv_pallas.1} parent=35 // pred_check_branch
        %263 = sbr.rel (%p261) target = $region44
      $region43: #{dsconv_pallas.1} parent=35 // pred_region
        %s264 = sadd.s32 %s21, 1
        %p265 = scmp.lt.s32.totalorder %s20, 1
        %s266 = scalar_select %p265, %s20, 1
        %p267 = scmp.lt.s32.totalorder %s264, 2
        %s268 = scalar_select %p267, %s264, 2
        %s269 = smul.addr %s266, 3
        %s270 = sadd.s32 %s268, %s269
        %s271 = smul.addr %s270, 8
        %s272 = scalar_lea.vmem %s1, %s271
        %s273 = sadd.s32 %s21, 1
      $region44: #{dsconv_pallas.1} parent=35 // pred_fallthru
        _
    $region36: #{dsconv_pallas.1} parent=5 // pred_fallthru
      _
    %p274 = scmp.le.s32.totalorder 1, %s13
    %p275 = scmp.lt.s32.totalorder %s13, 5
    %p276 = pnand %p274, %p275
    %p277 = pneg %p276
    // Predicated region
    $region45: #{dsconv_pallas.1} parent=5 // pred_check
      _
    $region46: #{dsconv_pallas.1} parent=5 // pred_check_branch
      %279 = sbr.rel (%p276) target = $region48
    $region47: #{dsconv_pallas.1} parent=5 // pred_region
      %s280 = ssub.s32 %s13, 1
      %p281 = scmp.lt.s32.totalorder %s22, 1
      %s282 = scalar_select %p281, %s22, 1
      %p283 = scmp.lt.s32.totalorder %s23, 2
      %s284 = scalar_select %p283, %s23, 2
      %s285 = smul.addr %s282, 3
      %s286 = sadd.s32 %s284, %s285
      %s287 = smul.addr %s286, 8
      %s288 = scalar_lea.vmem %s0, %s287
      %p289 = pneg %p53
      %p290 = pneg %p50
      %s291 = sadd.s32 %s23, 1
      %p292 = scmp.lt.s32.totalorder %s22, 1
      %s293 = scalar_select %p292, %s22, 1
      %p294 = scmp.lt.s32.totalorder %s291, 2
      %s295 = scalar_select %p294, %s291, 2
      %s296 = smul.addr %s293, 3
      %s297 = sadd.s32 %s295, %s296
      %s298 = smul.addr %s297, 8
      %s299 = scalar_lea.vmem %s1, %s298
      %p300 = pneg %p83
      %p301 = pneg %p80
      %p302 = pneg %p104
      %p303 = pneg %p101
      %p304 = pneg %p125
      %p305 = pneg %p122
      %p306 = pneg %p146
      %p307 = pneg %p143
      %p308 = pneg %p167
      %p309 = pneg %p164
      %p310 = pneg %p188
      %p311 = pneg %p185
      %p312 = pneg %p216
      %p313 = pneg %p213
      %p314 = scmp.lt.s32.totalorder %s22, 1
      %s315 = scalar_select %p314, %s22, 1
      %p316 = scmp.lt.s32.totalorder %s23, 1
      %s317 = scalar_select %p316, %s23, 1
      %s318 = smul.addr %s317, 16
      %s319 = smul.addr %s315, 32
      %s320 = sadd.s32 %s318, %s319
      %s321 = smul.addr %s320, 8
      %s322 = scalar_lea.vmem %s7, %s321
      %p323 = scmp.lt.s32.totalorder %s22, 1
      %s324 = scalar_select %p323, %s22, 1
      %p325 = scmp.lt.s32.totalorder %s23, 2
      %s326 = scalar_select %p325, %s23, 2
      %s327 = smul.addr %s324, 3
      %s328 = sadd.s32 %s326, %s327
      %s329 = smul.addr %s328, 8
      %s330 = scalar_lea.vmem %s0, %s329
      %s331 = sadd.s32 %s23, 1
      %p332 = scmp.lt.s32.totalorder %s22, 1
      %s333 = scalar_select %p332, %s22, 1
      %p334 = scmp.lt.s32.totalorder %s331, 2
      %s335 = scalar_select %p334, %s331, 2
      %s336 = smul.addr %s333, 3
      %s337 = sadd.s32 %s335, %s336
      %s338 = smul.addr %s337, 8
      %s339 = scalar_lea.vmem %s1, %s338
      %s340 = sadd.s32 %s23, 1
      %p341 = scmp.lt.s32.totalorder %s22, 1
      %s342 = scalar_select %p341, %s22, 1
      %p343 = scmp.lt.s32.totalorder %s23, 1
      %s344 = scalar_select %p343, %s23, 1
      %s345 = smul.addr %s344, 16
      %s346 = smul.addr %s342, 32
      %s347 = sadd.s32 %s345, %s346
      %s348 = smul.addr %s347, 8
      %s349 = scalar_lea.vmem %s7, %s348
      %v350 = vld [vmem:[%s330] sm:$0xff]
      %v351 = vld [vmem:[%s339] sm:$0x3]
      %v352 = vld [vmem:[%s2] sm:$0xff]
      %v353 = vld [vmem:[%s2 + $0x8] sm:$0x1]
      %v354 = vlaneseq
      %v355 = vshrl.u32 %v354, 7
      %v356 = vsub.s32 0, %v355
      %v357 = vrot.slane %v352, %v356
      %v358 = vmul.f32 %v350, %v357
      %v359 = vlaneseq
      %v360 = vshrl.u32 %v359, 7
      %v361 = vsub.s32 1, %v360
      %v362 = vrot.slane %v352, %v361
      %364 = vrot.lane.b32.xlu0 %v362, 4
      %v365 = vpop.permute.xlu0 %364
      %v367 = vmul.f32 %v350, %v365
      %369 = vrot.lane.b32.xlu0 %v367, 124
      %v370 = vpop.permute.xlu0 %369
      %v372 = vadd.f32 %v358, %v370
      %v373 = vlaneseq
      %v374 = vshrl.u32 %v373, 7
      %v375 = vsub.s32 2, %v374
      %v376 = vrot.slane %v352, %v375
      %378 = vrot.lane.b32.xlu0 %v376, 8
      %v379 = vpop.permute.xlu0 %378
      %v381 = vmul.f32 %v350, %v379
      %383 = vrot.lane.b32.xlu0 %v381, 120
      %v384 = vpop.permute.xlu0 %383
      %v386 = vadd.f32 %v372, %v384
      %v387 = vlaneseq
      %v388 = vshrl.u32 %v387, 7
      %v389 = vsub.s32 3, %v388
      %v390 = vrot.slane %v352, %v389
      %v391 = vmul.f32 %v350, %v390
      %v392 = vmul.f32 %v351, %v390
      %vm395 = vcmask 1046528
      %v396 = vrot.slane %v391, 1
      %v397 = vrot.slane %v392, 1
      %v398 = vsel %vm395, %v396, %v397
      %v400 = vadd.f32 %v386, %v398
      %v401 = vlaneseq
      %v402 = vshrl.u32 %v401, 7
      %v403 = vsub.s32 4, %v402
      %v404 = vrot.slane %v352, %v403
      %406 = vrot.lane.b32.xlu0 %v404, 4
      %v407 = vpop.permute.xlu0 %406
      %v409 = vmul.f32 %v350, %v407
      %v410 = vmul.f32 %v351, %v407
      %v413 = vrot.slane %v409, 1
      %v414 = vrot.slane %v410, 1
      %v415 = vsel %vm395, %v413, %v414
      %416 = vrot.lane.b32.xlu0 %v415, 124
      %v417 = vpop.permute.xlu0 %416
      %v419 = vadd.f32 %v400, %v417
      %v420 = vlaneseq
      %v421 = vshrl.u32 %v420, 7
      %v422 = vsub.s32 5, %v421
      %v423 = vrot.slane %v352, %v422
      %425 = vrot.lane.b32.xlu0 %v423, 8
      %v426 = vpop.permute.xlu0 %425
      %v428 = vmul.f32 %v350, %v426
      %v429 = vmul.f32 %v351, %v426
      %v432 = vrot.slane %v428, 1
      %v433 = vrot.slane %v429, 1
      %v434 = vsel %vm395, %v432, %v433
      %435 = vrot.lane.b32.xlu0 %v434, 120
      %v436 = vpop.permute.xlu0 %435
      %v438 = vadd.f32 %v419, %v436
      %v439 = vlaneseq
      %v440 = vshrl.u32 %v439, 7
      %v441 = vsub.s32 6, %v440
      %v442 = vrot.slane %v352, %v441
      %v443 = vmul.f32 %v350, %v442
      %v444 = vmul.f32 %v351, %v442
      %vm447 = vcmask 1045504
      %v448 = vrot.slane %v443, 2
      %v449 = vrot.slane %v444, 2
      %v450 = vsel %vm447, %v448, %v449
      %v452 = vadd.f32 %v438, %v450
      %v453 = vlaneseq
      %v454 = vshrl.u32 %v453, 7
      %v455 = vsub.s32 7, %v454
      %v456 = vrot.slane %v352, %v455
      %458 = vrot.lane.b32.xlu0 %v456, 4
      %v459 = vpop.permute.xlu0 %458
      %v461 = vmul.f32 %v350, %v459
      %v462 = vmul.f32 %v351, %v459
      %v465 = vrot.slane %v461, 2
      %v466 = vrot.slane %v462, 2
      %v467 = vsel %vm447, %v465, %v466
      %468 = vrot.lane.b32.xlu0 %v467, 124
      %v469 = vpop.permute.xlu0 %468
      %v471 = vadd.f32 %v452, %v469
      %v472 = vlaneseq
      %v473 = vshrl.u32 %v472, 7
      %v474 = vsub.s32 0, %v473
      %v475 = vrot.slane %v353, %v474
      %477 = vrot.lane.b32.xlu0 %v475, 8
      %v478 = vpop.permute.xlu0 %477
      %v480 = vmul.f32 %v350, %v478
      %v481 = vmul.f32 %v351, %v478
      %v484 = vrot.slane %v480, 2
      %v485 = vrot.slane %v481, 2
      %v486 = vsel %vm447, %v484, %v485
      %487 = vrot.lane.b32.xlu0 %v486, 120
      %v488 = vpop.permute.xlu0 %487
      %v490 = vadd.f32 %v471, %v488
      %v491 = vld [vmem:[%s3] sm:$0x1]
      %v493 = vlaneseq
      %v494 = vshrl.u32 %v493, 7
      %v495 = vsub.s32 0, %v494
      %v496 = vrot.slane %v491, %v495
      %v498 = vadd.f32 %v490, %v496
      %v499 = vmax.f32 %v498, 0.0
      %v500 = vld [vmem:[%s4] sm:$0xff]
      %v501 = vld [vmem:[%s4 + $0x8] sm:$0xff]
      %v502 = vld [vmem:[%s4 + $0x10] sm:$0xff]
      %v503 = vld [vmem:[%s4 + $0x18] sm:$0xff]
      %v504 = vld [vmem:[%s4 + $0x20] sm:$0xff]
      %v505 = vld [vmem:[%s4 + $0x28] sm:$0xff]
      %v506 = vld [vmem:[%s4 + $0x30] sm:$0xff]
      %v507 = vld [vmem:[%s4 + $0x38] sm:$0xff]
      %v508 = vld [vmem:[%s4 + $0x40] sm:$0xff]
      %v509 = vld [vmem:[%s4 + $0x48] sm:$0xff]
      %v510 = vld [vmem:[%s4 + $0x50] sm:$0xff]
      %v511 = vld [vmem:[%s4 + $0x58] sm:$0xff]
      %v512 = vld [vmem:[%s4 + $0x60] sm:$0xff]
      %v513 = vld [vmem:[%s4 + $0x68] sm:$0xff]
      %v514 = vld [vmem:[%s4 + $0x70] sm:$0xff]
      %v515 = vld [vmem:[%s4 + $0x78] sm:$0xff]
      %v516 = vld [vmem:[%s4 + $0x80] sm:$0xff]
      %v517 = vld [vmem:[%s4 + $0x88] sm:$0xff]
      %v518 = vld [vmem:[%s4 + $0x90] sm:$0xff]
      %v519 = vld [vmem:[%s4 + $0x98] sm:$0xff]
      %v520 = vld [vmem:[%s4 + $0xa0] sm:$0xff]
      %v521 = vld [vmem:[%s4 + $0xa8] sm:$0xff]
      %v522 = vld [vmem:[%s4 + $0xb0] sm:$0xff]
      %v523 = vld [vmem:[%s4 + $0xb8] sm:$0xff]
      %v524 = vld [vmem:[%s4 + $0xc0] sm:$0xff]
      %v525 = vld [vmem:[%s4 + $0xc8] sm:$0xff]
      %v526 = vld [vmem:[%s4 + $0xd0] sm:$0xff]
      %v527 = vld [vmem:[%s4 + $0xd8] sm:$0xff]
      %v528 = vld [vmem:[%s4 + $0xe0] sm:$0xff]
      %v529 = vld [vmem:[%s4 + $0xe8] sm:$0xff]
      %v530 = vld [vmem:[%s4 + $0xf0] sm:$0xff]
      %v531 = vld [vmem:[%s4 + $0xf8] sm:$0xff]
      %v532 = vld [vmem:[%s4 + $0x100] sm:$0xff]
      %v533 = vld [vmem:[%s4 + $0x108] sm:$0xff]
      %v534 = vld [vmem:[%s4 + $0x110] sm:$0xff]
      %v535 = vld [vmem:[%s4 + $0x118] sm:$0xff]
      %v536 = vld [vmem:[%s4 + $0x120] sm:$0xff]
      %v537 = vld [vmem:[%s4 + $0x128] sm:$0xff]
      %v538 = vld [vmem:[%s4 + $0x130] sm:$0xff]
      %v539 = vld [vmem:[%s4 + $0x138] sm:$0xff]
      %v540 = vld [vmem:[%s4 + $0x140] sm:$0xff]
      %v541 = vld [vmem:[%s4 + $0x148] sm:$0xff]
      %v542 = vld [vmem:[%s4 + $0x150] sm:$0xff]
      %v543 = vld [vmem:[%s4 + $0x158] sm:$0xff]
      %v544 = vld [vmem:[%s4 + $0x160] sm:$0xff]
      %v545 = vld [vmem:[%s4 + $0x168] sm:$0xff]
      %v546 = vld [vmem:[%s4 + $0x170] sm:$0xff]
      %v547 = vld [vmem:[%s4 + $0x178] sm:$0xff]
      %v548 = vld [vmem:[%s4 + $0x180] sm:$0xff]
      %v549 = vld [vmem:[%s4 + $0x188] sm:$0xff]
      %v550 = vld [vmem:[%s4 + $0x190] sm:$0xff]
      %v551 = vld [vmem:[%s4 + $0x198] sm:$0xff]
      %v552 = vld [vmem:[%s4 + $0x1a0] sm:$0xff]
      %v553 = vld [vmem:[%s4 + $0x1a8] sm:$0xff]
      %v554 = vld [vmem:[%s4 + $0x1b0] sm:$0xff]
      %v555 = vld [vmem:[%s4 + $0x1b8] sm:$0xff]
      %v556 = vld [vmem:[%s4 + $0x1c0] sm:$0xff]
      %v557 = vld [vmem:[%s4 + $0x1c8] sm:$0xff]
      %v558 = vld [vmem:[%s4 + $0x1d0] sm:$0xff]
      %v559 = vld [vmem:[%s4 + $0x1d8] sm:$0xff]
      %v560 = vld [vmem:[%s4 + $0x1e0] sm:$0xff]
      %v561 = vld [vmem:[%s4 + $0x1e8] sm:$0xff]
      %v562 = vld [vmem:[%s4 + $0x1f0] sm:$0xff]
      %v563 = vld [vmem:[%s4 + $0x1f8] sm:$0xff]
      %v564 = vld [vmem:[%s4 + $0x200] sm:$0xff]
      %v565 = vld [vmem:[%s4 + $0x208] sm:$0xff]
      %v566 = vld [vmem:[%s4 + $0x210] sm:$0xff]
      %v567 = vld [vmem:[%s4 + $0x218] sm:$0xff]
      %v568 = vld [vmem:[%s4 + $0x220] sm:$0xff]
      %v569 = vld [vmem:[%s4 + $0x228] sm:$0xff]
      %v570 = vld [vmem:[%s4 + $0x230] sm:$0xff]
      %v571 = vld [vmem:[%s4 + $0x238] sm:$0xff]
      %v572 = vld [vmem:[%s4 + $0x240] sm:$0xff]
      %v573 = vld [vmem:[%s4 + $0x248] sm:$0xff]
      %v574 = vld [vmem:[%s4 + $0x250] sm:$0xff]
      %v575 = vld [vmem:[%s4 + $0x258] sm:$0xff]
      %v576 = vld [vmem:[%s4 + $0x260] sm:$0xff]
      %v577 = vld [vmem:[%s4 + $0x268] sm:$0xff]
      %v578 = vld [vmem:[%s4 + $0x270] sm:$0xff]
      %v579 = vld [vmem:[%s4 + $0x278] sm:$0xff]
      %v580 = vld [vmem:[%s4 + $0x280] sm:$0xff]
      %v581 = vld [vmem:[%s4 + $0x288] sm:$0xff]
      %v582 = vld [vmem:[%s4 + $0x290] sm:$0xff]
      %v583 = vld [vmem:[%s4 + $0x298] sm:$0xff]
      %v584 = vld [vmem:[%s4 + $0x2a0] sm:$0xff]
      %v585 = vld [vmem:[%s4 + $0x2a8] sm:$0xff]
      %v586 = vld [vmem:[%s4 + $0x2b0] sm:$0xff]
      %v587 = vld [vmem:[%s4 + $0x2b8] sm:$0xff]
      %v588 = vld [vmem:[%s4 + $0x2c0] sm:$0xff]
      %v589 = vld [vmem:[%s4 + $0x2c8] sm:$0xff]
      %v590 = vld [vmem:[%s4 + $0x2d0] sm:$0xff]
      %v591 = vld [vmem:[%s4 + $0x2d8] sm:$0xff]
      %v592 = vld [vmem:[%s4 + $0x2e0] sm:$0xff]
      %v593 = vld [vmem:[%s4 + $0x2e8] sm:$0xff]
      %v594 = vld [vmem:[%s4 + $0x2f0] sm:$0xff]
      %v595 = vld [vmem:[%s4 + $0x2f8] sm:$0xff]
      %v596 = vld [vmem:[%s4 + $0x300] sm:$0xff]
      %v597 = vld [vmem:[%s4 + $0x308] sm:$0xff]
      %v598 = vld [vmem:[%s4 + $0x310] sm:$0xff]
      %v599 = vld [vmem:[%s4 + $0x318] sm:$0xff]
      %v600 = vld [vmem:[%s4 + $0x320] sm:$0xff]
      %v601 = vld [vmem:[%s4 + $0x328] sm:$0xff]
      %v602 = vld [vmem:[%s4 + $0x330] sm:$0xff]
      %v603 = vld [vmem:[%s4 + $0x338] sm:$0xff]
      %v604 = vld [vmem:[%s4 + $0x340] sm:$0xff]
      %v605 = vld [vmem:[%s4 + $0x348] sm:$0xff]
      %v606 = vld [vmem:[%s4 + $0x350] sm:$0xff]
      %v607 = vld [vmem:[%s4 + $0x358] sm:$0xff]
      %v608 = vld [vmem:[%s4 + $0x360] sm:$0xff]
      %v609 = vld [vmem:[%s4 + $0x368] sm:$0xff]
      %v610 = vld [vmem:[%s4 + $0x370] sm:$0xff]
      %v611 = vld [vmem:[%s4 + $0x378] sm:$0xff]
      %v612 = vld [vmem:[%s4 + $0x380] sm:$0xff]
      %v613 = vld [vmem:[%s4 + $0x388] sm:$0xff]
      %v614 = vld [vmem:[%s4 + $0x390] sm:$0xff]
      %v615 = vld [vmem:[%s4 + $0x398] sm:$0xff]
      %v616 = vld [vmem:[%s4 + $0x3a0] sm:$0xff]
      %v617 = vld [vmem:[%s4 + $0x3a8] sm:$0xff]
      %v618 = vld [vmem:[%s4 + $0x3b0] sm:$0xff]
      %v619 = vld [vmem:[%s4 + $0x3b8] sm:$0xff]
      %v620 = vld [vmem:[%s4 + $0x3c0] sm:$0xff]
      %v621 = vld [vmem:[%s4 + $0x3c8] sm:$0xff]
      %v622 = vld [vmem:[%s4 + $0x3d0] sm:$0xff]
      %v623 = vld [vmem:[%s4 + $0x3d8] sm:$0xff]
      %v624 = vld [vmem:[%s4 + $0x3e0] sm:$0xff]
      %v625 = vld [vmem:[%s4 + $0x3e8] sm:$0xff]
      %v626 = vld [vmem:[%s4 + $0x3f0] sm:$0xff]
      %v627 = vld [vmem:[%s4 + $0x3f8] sm:$0xff]
      %v628 = vld [vmem:[%s5] sm:$0xff]
      %v629 = vld [vmem:[%s5 + $0x8] sm:$0xff]
      %v630 = vld [vmem:[%s6] sm:$0xff]
      %v631 = vld [vmem:[%s6 + $0x8] sm:$0xff]
      %vm632 = vcmask 523264
      %v634 = vsel %vm632, %v499, 0
      %636 = vmatprep.subr.mxu0 0.0
      %637 = vmatpush1.msra.mxu0 0.0
      %638 = vmatprep.subr.mxu0 0.0
      %639 = vmatpush1.msra.mxu0 0.0
      %640 = vmatprep.subr.mxu0 0.0
      %641 = vmatpush1.msra.mxu0 0.0
      %642 = vmatprep.subr.mxu0 0.0
      %643 = vmatpush1.msra.mxu0 0.0
      %644 = vmatprep.subr.mxu0 0.0
      %645 = vmatpush1.msra.mxu0 0.0
      %646 = vmatprep.subr.mxu0 0.0
      %647 = vmatpush1.msra.mxu0 0.0
      %648 = vmatprep.subr.mxu0 0.0
      %649 = vmatpush1.msra.mxu0 0.0
      %650 = vmatprep.subr.mxu0 0.0
      %651 = vmatpush1.msra.mxu0 0.0
      %652 = vmatprep.subr.mxu0 %v613
      %653 = vmatpush1.msra.mxu0 %v612
      %654 = vmatprep.subr.mxu0 %v597
      %655 = vmatpush1.msra.mxu0 %v596
      %656 = vmatprep.subr.mxu0 %v581
      %657 = vmatpush1.msra.mxu0 %v580
      %658 = vmatprep.subr.mxu0 %v565
      %659 = vmatpush1.msra.mxu0 %v564
      %660 = vmatprep.subr.mxu0 %v549
      %661 = vmatpush1.msra.mxu0 %v548
      %662 = vmatprep.subr.mxu0 %v533
      %663 = vmatpush1.msra.mxu0 %v532
      %664 = vmatprep.subr.mxu0 %v517
      %665 = vmatpush1.msra.mxu0 %v516
      %666 = vmatprep.subr.mxu0 %v501
      %667 = vmatpush1.msra.mxu0 %v500
      %668 = vmatprep.subr.mxu0 0.0
      %669 = vmatpush2.msra.mxu0 0.0
      %670 = vmatprep.subr.mxu0 0.0
      %671 = vmatpush2.msra.mxu0 0.0
      %672 = vmatprep.subr.mxu0 0.0
      %673 = vmatpush2.msra.mxu0 0.0
      %674 = vmatprep.subr.mxu0 0.0
      %675 = vmatpush2.msra.mxu0 0.0
      %676 = vmatprep.subr.mxu0 0.0
      %677 = vmatpush2.msra.mxu0 0.0
      %678 = vmatprep.subr.mxu0 0.0
      %679 = vmatpush2.msra.mxu0 0.0
      %680 = vmatprep.subr.mxu0 0.0
      %681 = vmatpush2.msra.mxu0 0.0
      %682 = vmatprep.subr.mxu0 0.0
      %683 = vmatpush2.msra.mxu0 0.0
      %684 = vmatprep.subr.mxu0 0.0
      %685 = vmatpush2.msra.mxu0 0.0
      %686 = vmatprep.subr.mxu0 0.0
      %687 = vmatpush2.msra.mxu0 0.0
      %688 = vmatprep.subr.mxu0 0.0
      %689 = vmatpush2.msra.mxu0 0.0
      %690 = vmatprep.subr.mxu0 0.0
      %691 = vmatpush2.msra.mxu0 0.0
      %692 = vmatprep.subr.mxu0 0.0
      %693 = vmatpush2.msra.mxu0 0.0
      %694 = vmatprep.subr.mxu0 0.0
      %695 = vmatpush2.msra.mxu0 0.0
      %696 = vmatprep.subr.mxu0 0.0
      %697 = vmatpush2.msra.mxu0 0.0
      %698 = vmatprep.subr.mxu0 0.0
      %699 = vmatpush2.msra.mxu0 0.0
      %700 = vmatprep.mubr.f32.mxu0 0.0
      %701 = vmatmul.mubr.f32.gmra.mxu0 %v634
      %v702 = vpop.f32.mrf.mxu0
      %v703 = vadd.f32 0.0, %v702
      %v704 = vpop.f32.mrf.mxu0
      %v705 = vadd.f32 0.0, %v704
      %706 = vdwg.mxu0
      %707 = vmatprep.subr.mxu0 0.0
      %708 = vmatpush1.msra.mxu0 0.0
      %709 = vmatprep.subr.mxu0 0.0
      %710 = vmatpush1.msra.mxu0 0.0
      %711 = vmatprep.subr.mxu0 0.0
      %712 = vmatpush1.msra.mxu0 0.0
      %713 = vmatprep.subr.mxu0 0.0
      %714 = vmatpush1.msra.mxu0 0.0
      %715 = vmatprep.subr.mxu0 0.0
      %716 = vmatpush1.msra.mxu0 0.0
      %717 = vmatprep.subr.mxu0 0.0
      %718 = vmatpush1.msra.mxu0 0.0
      %719 = vmatprep.subr.mxu0 0.0
      %720 = vmatpush1.msra.mxu0 0.0
      %721 = vmatprep.subr.mxu0 0.0
      %722 = vmatpush1.msra.mxu0 0.0
      %723 = vmatprep.subr.mxu0 %v615
      %724 = vmatpush1.msra.mxu0 %v614
      %725 = vmatprep.subr.mxu0 %v599
      %726 = vmatpush1.msra.mxu0 %v598
      %727 = vmatprep.subr.mxu0 %v583
      %728 = vmatpush1.msra.mxu0 %v582
      %729 = vmatprep.subr.mxu0 %v567
      %730 = vmatpush1.msra.mxu0 %v566
      %731 = vmatprep.subr.mxu0 %v551
      %732 = vmatpush1.msra.mxu0 %v550
      %733 = vmatprep.subr.mxu0 %v535
      %734 = vmatpush1.msra.mxu0 %v534
      %735 = vmatprep.subr.mxu0 %v519
      %736 = vmatpush1.msra.mxu0 %v518
      %737 = vmatprep.subr.mxu0 %v503
      %738 = vmatpush1.msra.mxu0 %v502
      %739 = vmatprep.subr.mxu0 0.0
      %740 = vmatpush2.msra.mxu0 0.0
      %741 = vmatprep.subr.mxu0 0.0
      %742 = vmatpush2.msra.mxu0 0.0
      %743 = vmatprep.subr.mxu0 0.0
      %744 = vmatpush2.msra.mxu0 0.0
      %745 = vmatprep.subr.mxu0 0.0
      %746 = vmatpush2.msra.mxu0 0.0
      %747 = vmatprep.subr.mxu0 0.0
      %748 = vmatpush2.msra.mxu0 0.0
      %749 = vmatprep.subr.mxu0 0.0
      %750 = vmatpush2.msra.mxu0 0.0
      %751 = vmatprep.subr.mxu0 0.0
      %752 = vmatpush2.msra.mxu0 0.0
      %753 = vmatprep.subr.mxu0 0.0
      %754 = vmatpush2.msra.mxu0 0.0
      %755 = vmatprep.subr.mxu0 0.0
      %756 = vmatpush2.msra.mxu0 0.0
      %757 = vmatprep.subr.mxu0 0.0
      %758 = vmatpush2.msra.mxu0 0.0
      %759 = vmatprep.subr.mxu0 0.0
      %760 = vmatpush2.msra.mxu0 0.0
      %761 = vmatprep.subr.mxu0 0.0
      %762 = vmatpush2.msra.mxu0 0.0
      %763 = vmatprep.subr.mxu0 0.0
      %764 = vmatpush2.msra.mxu0 0.0
      %765 = vmatprep.subr.mxu0 0.0
      %766 = vmatpush2.msra.mxu0 0.0
      %767 = vmatprep.subr.mxu0 0.0
      %768 = vmatpush2.msra.mxu0 0.0
      %769 = vmatprep.subr.mxu0 0.0
      %770 = vmatpush2.msra.mxu0 0.0
      %771 = vmatprep.mubr.f32.mxu0 0.0
      %772 = vmatmul.mubr.f32.gmra.mxu0 %v634
      %v773 = vpop.f32.mrf.mxu0
      %v774 = vadd.f32 0.0, %v773
      %v775 = vpop.f32.mrf.mxu0
      %v776 = vadd.f32 0.0, %v775
      %777 = vdwg.mxu0
      %778 = vmatprep.subr.mxu0 0.0
      %779 = vmatpush1.msra.mxu0 0.0
      %780 = vmatprep.subr.mxu0 0.0
      %781 = vmatpush1.msra.mxu0 0.0
      %782 = vmatprep.subr.mxu0 0.0
      %783 = vmatpush1.msra.mxu0 0.0
      %784 = vmatprep.subr.mxu0 0.0
      %785 = vmatpush1.msra.mxu0 0.0
      %786 = vmatprep.subr.mxu0 0.0
      %787 = vmatpush1.msra.mxu0 0.0
      %788 = vmatprep.subr.mxu0 0.0
      %789 = vmatpush1.msra.mxu0 0.0
      %790 = vmatprep.subr.mxu0 0.0
      %791 = vmatpush1.msra.mxu0 0.0
      %792 = vmatprep.subr.mxu0 0.0
      %793 = vmatpush1.msra.mxu0 0.0
      %794 = vmatprep.subr.mxu0 %v617
      %795 = vmatpush1.msra.mxu0 %v616
      %796 = vmatprep.subr.mxu0 %v601
      %797 = vmatpush1.msra.mxu0 %v600
      %798 = vmatprep.subr.mxu0 %v585
      %799 = vmatpush1.msra.mxu0 %v584
      %800 = vmatprep.subr.mxu0 %v569
      %801 = vmatpush1.msra.mxu0 %v568
      %802 = vmatprep.subr.mxu0 %v553
      %803 = vmatpush1.msra.mxu0 %v552
      %804 = vmatprep.subr.mxu0 %v537
      %805 = vmatpush1.msra.mxu0 %v536
      %806 = vmatprep.subr.mxu0 %v521
      %807 = vmatpush1.msra.mxu0 %v520
      %808 = vmatprep.subr.mxu0 %v505
      %809 = vmatpush1.msra.mxu0 %v504
      %810 = vmatprep.subr.mxu0 0.0
      %811 = vmatpush2.msra.mxu0 0.0
      %812 = vmatprep.subr.mxu0 0.0
      %813 = vmatpush2.msra.mxu0 0.0
      %814 = vmatprep.subr.mxu0 0.0
      %815 = vmatpush2.msra.mxu0 0.0
      %816 = vmatprep.subr.mxu0 0.0
      %817 = vmatpush2.msra.mxu0 0.0
      %818 = vmatprep.subr.mxu0 0.0
      %819 = vmatpush2.msra.mxu0 0.0
      %820 = vmatprep.subr.mxu0 0.0
      %821 = vmatpush2.msra.mxu0 0.0
      %822 = vmatprep.subr.mxu0 0.0
      %823 = vmatpush2.msra.mxu0 0.0
      %824 = vmatprep.subr.mxu0 0.0
      %825 = vmatpush2.msra.mxu0 0.0
      %826 = vmatprep.subr.mxu0 0.0
      %827 = vmatpush2.msra.mxu0 0.0
      %828 = vmatprep.subr.mxu0 0.0
      %829 = vmatpush2.msra.mxu0 0.0
      %830 = vmatprep.subr.mxu0 0.0
      %831 = vmatpush2.msra.mxu0 0.0
      %832 = vmatprep.subr.mxu0 0.0
      %833 = vmatpush2.msra.mxu0 0.0
      %834 = vmatprep.subr.mxu0 0.0
      %835 = vmatpush2.msra.mxu0 0.0
      %836 = vmatprep.subr.mxu0 0.0
      %837 = vmatpush2.msra.mxu0 0.0
      %838 = vmatprep.subr.mxu0 0.0
      %839 = vmatpush2.msra.mxu0 0.0
      %840 = vmatprep.subr.mxu0 0.0
      %841 = vmatpush2.msra.mxu0 0.0
      %842 = vmatprep.mubr.f32.mxu0 0.0
      %843 = vmatmul.mubr.f32.gmra.mxu0 %v634
      %v844 = vpop.f32.mrf.mxu0
      %v845 = vadd.f32 0.0, %v844
      %v846 = vpop.f32.mrf.mxu0
      %v847 = vadd.f32 0.0, %v846
      %848 = vdwg.mxu0
      %849 = vmatprep.subr.mxu0 0.0
      %850 = vmatpush1.msra.mxu0 0.0
      %851 = vmatprep.subr.mxu0 0.0
      %852 = vmatpush1.msra.mxu0 0.0
      %853 = vmatprep.subr.mxu0 0.0
      %854 = vmatpush1.msra.mxu0 0.0
      %855 = vmatprep.subr.mxu0 0.0
      %856 = vmatpush1.msra.mxu0 0.0
      %857 = vmatprep.subr.mxu0 0.0
      %858 = vmatpush1.msra.mxu0 0.0
      %859 = vmatprep.subr.mxu0 0.0
      %860 = vmatpush1.msra.mxu0 0.0
      %861 = vmatprep.subr.mxu0 0.0
      %862 = vmatpush1.msra.mxu0 0.0
      %863 = vmatprep.subr.mxu0 0.0
      %864 = vmatpush1.msra.mxu0 0.0
      %865 = vmatprep.subr.mxu0 %v619
      %866 = vmatpush1.msra.mxu0 %v618
      %867 = vmatprep.subr.mxu0 %v603
      %868 = vmatpush1.msra.mxu0 %v602
      %869 = vmatprep.subr.mxu0 %v587
      %870 = vmatpush1.msra.mxu0 %v586
      %871 = vmatprep.subr.mxu0 %v571
      %872 = vmatpush1.msra.mxu0 %v570
      %873 = vmatprep.subr.mxu0 %v555
      %874 = vmatpush1.msra.mxu0 %v554
      %875 = vmatprep.subr.mxu0 %v539
      %876 = vmatpush1.msra.mxu0 %v538
      %877 = vmatprep.subr.mxu0 %v523
      %878 = vmatpush1.msra.mxu0 %v522
      %879 = vmatprep.subr.mxu0 %v507
      %880 = vmatpush1.msra.mxu0 %v506
      %881 = vmatprep.subr.mxu0 0.0
      %882 = vmatpush2.msra.mxu0 0.0
      %883 = vmatprep.subr.mxu0 0.0
      %884 = vmatpush2.msra.mxu0 0.0
      %885 = vmatprep.subr.mxu0 0.0
      %886 = vmatpush2.msra.mxu0 0.0
      %887 = vmatprep.subr.mxu0 0.0
      %888 = vmatpush2.msra.mxu0 0.0
      %889 = vmatprep.subr.mxu0 0.0
      %890 = vmatpush2.msra.mxu0 0.0
      %891 = vmatprep.subr.mxu0 0.0
      %892 = vmatpush2.msra.mxu0 0.0
      %893 = vmatprep.subr.mxu0 0.0
      %894 = vmatpush2.msra.mxu0 0.0
      %895 = vmatprep.subr.mxu0 0.0
      %896 = vmatpush2.msra.mxu0 0.0
      %897 = vmatprep.subr.mxu0 0.0
      %898 = vmatpush2.msra.mxu0 0.0
      %899 = vmatprep.subr.mxu0 0.0
      %900 = vmatpush2.msra.mxu0 0.0
      %901 = vmatprep.subr.mxu0 0.0
      %902 = vmatpush2.msra.mxu0 0.0
      %903 = vmatprep.subr.mxu0 0.0
      %904 = vmatpush2.msra.mxu0 0.0
      %905 = vmatprep.subr.mxu0 0.0
      %906 = vmatpush2.msra.mxu0 0.0
      %907 = vmatprep.subr.mxu0 0.0
      %908 = vmatpush2.msra.mxu0 0.0
      %909 = vmatprep.subr.mxu0 0.0
      %910 = vmatpush2.msra.mxu0 0.0
      %911 = vmatprep.subr.mxu0 0.0
      %912 = vmatpush2.msra.mxu0 0.0
      %913 = vmatprep.mubr.f32.mxu0 0.0
      %914 = vmatmul.mubr.f32.gmra.mxu0 %v634
      %v915 = vpop.f32.mrf.mxu0
      %v916 = vadd.f32 0.0, %v915
      %v917 = vpop.f32.mrf.mxu0
      %v918 = vadd.f32 0.0, %v917
      %919 = vdwg.mxu0
      %920 = vmatprep.subr.mxu0 0.0
      %921 = vmatpush1.msra.mxu0 0.0
      %922 = vmatprep.subr.mxu0 0.0
      %923 = vmatpush1.msra.mxu0 0.0
      %924 = vmatprep.subr.mxu0 0.0
      %925 = vmatpush1.msra.mxu0 0.0
      %926 = vmatprep.subr.mxu0 0.0
      %927 = vmatpush1.msra.mxu0 0.0
      %928 = vmatprep.subr.mxu0 0.0
      %929 = vmatpush1.msra.mxu0 0.0
      %930 = vmatprep.subr.mxu0 0.0
      %931 = vmatpush1.msra.mxu0 0.0
      %932 = vmatprep.subr.mxu0 0.0
      %933 = vmatpush1.msra.mxu0 0.0
      %934 = vmatprep.subr.mxu0 0.0
      %935 = vmatpush1.msra.mxu0 0.0
      %936 = vmatprep.subr.mxu0 %v621
      %937 = vmatpush1.msra.mxu0 %v620
      %938 = vmatprep.subr.mxu0 %v605
      %939 = vmatpush1.msra.mxu0 %v604
      %940 = vmatprep.subr.mxu0 %v589
      %941 = vmatpush1.msra.mxu0 %v588
      %942 = vmatprep.subr.mxu0 %v573
      %943 = vmatpush1.msra.mxu0 %v572
      %944 = vmatprep.subr.mxu0 %v557
      %945 = vmatpush1.msra.mxu0 %v556
      %946 = vmatprep.subr.mxu0 %v541
      %947 = vmatpush1.msra.mxu0 %v540
      %948 = vmatprep.subr.mxu0 %v525
      %949 = vmatpush1.msra.mxu0 %v524
      %950 = vmatprep.subr.mxu0 %v509
      %951 = vmatpush1.msra.mxu0 %v508
      %952 = vmatprep.subr.mxu0 0.0
      %953 = vmatpush2.msra.mxu0 0.0
      %954 = vmatprep.subr.mxu0 0.0
      %955 = vmatpush2.msra.mxu0 0.0
      %956 = vmatprep.subr.mxu0 0.0
      %957 = vmatpush2.msra.mxu0 0.0
      %958 = vmatprep.subr.mxu0 0.0
      %959 = vmatpush2.msra.mxu0 0.0
      %960 = vmatprep.subr.mxu0 0.0
      %961 = vmatpush2.msra.mxu0 0.0
      %962 = vmatprep.subr.mxu0 0.0
      %963 = vmatpush2.msra.mxu0 0.0
      %964 = vmatprep.subr.mxu0 0.0
      %965 = vmatpush2.msra.mxu0 0.0
      %966 = vmatprep.subr.mxu0 0.0
      %967 = vmatpush2.msra.mxu0 0.0
      %968 = vmatprep.subr.mxu0 0.0
      %969 = vmatpush2.msra.mxu0 0.0
      %970 = vmatprep.subr.mxu0 0.0
      %971 = vmatpush2.msra.mxu0 0.0
      %972 = vmatprep.subr.mxu0 0.0
      %973 = vmatpush2.msra.mxu0 0.0
      %974 = vmatprep.subr.mxu0 0.0
      %975 = vmatpush2.msra.mxu0 0.0
      %976 = vmatprep.subr.mxu0 0.0
      %977 = vmatpush2.msra.mxu0 0.0
      %978 = vmatprep.subr.mxu0 0.0
      %979 = vmatpush2.msra.mxu0 0.0
      %980 = vmatprep.subr.mxu0 0.0
      %981 = vmatpush2.msra.mxu0 0.0
      %982 = vmatprep.subr.mxu0 0.0
      %983 = vmatpush2.msra.mxu0 0.0
      %984 = vmatprep.mubr.f32.mxu0 0.0
      %985 = vmatmul.mubr.f32.gmra.mxu0 %v634
      %v986 = vpop.f32.mrf.mxu0
      %v987 = vadd.f32 0.0, %v986
      %v988 = vpop.f32.mrf.mxu0
      %v989 = vadd.f32 0.0, %v988
      %990 = vdwg.mxu0
      %991 = vmatprep.subr.mxu0 0.0
      %992 = vmatpush1.msra.mxu0 0.0
      %993 = vmatprep.subr.mxu0 0.0
      %994 = vmatpush1.msra.mxu0 0.0
      %995 = vmatprep.subr.mxu0 0.0
      %996 = vmatpush1.msra.mxu0 0.0
      %997 = vmatprep.subr.mxu0 0.0
      %998 = vmatpush1.msra.mxu0 0.0
      %999 = vmatprep.subr.mxu0 0.0
      %1000 = vmatpush1.msra.mxu0 0.0
      %1001 = vmatprep.subr.mxu0 0.0
      %1002 = vmatpush1.msra.mxu0 0.0
      %1003 = vmatprep.subr.mxu0 0.0
      %1004 = vmatpush1.msra.mxu0 0.0
      %1005 = vmatprep.subr.mxu0 0.0
      %1006 = vmatpush1.msra.mxu0 0.0
      %1007 = vmatprep.subr.mxu0 %v623
      %1008 = vmatpush1.msra.mxu0 %v622
      %1009 = vmatprep.subr.mxu0 %v607
      %1010 = vmatpush1.msra.mxu0 %v606
      %1011 = vmatprep.subr.mxu0 %v591
      %1012 = vmatpush1.msra.mxu0 %v590
      %1013 = vmatprep.subr.mxu0 %v575
      %1014 = vmatpush1.msra.mxu0 %v574
      %1015 = vmatprep.subr.mxu0 %v559
      %1016 = vmatpush1.msra.mxu0 %v558
      %1017 = vmatprep.subr.mxu0 %v543
      %1018 = vmatpush1.msra.mxu0 %v542
      %1019 = vmatprep.subr.mxu0 %v527
      %1020 = vmatpush1.msra.mxu0 %v526
      %1021 = vmatprep.subr.mxu0 %v511
      %1022 = vmatpush1.msra.mxu0 %v510
      %1023 = vmatprep.subr.mxu0 0.0
      %1024 = vmatpush2.msra.mxu0 0.0
      %1025 = vmatprep.subr.mxu0 0.0
      %1026 = vmatpush2.msra.mxu0 0.0
      %1027 = vmatprep.subr.mxu0 0.0
      %1028 = vmatpush2.msra.mxu0 0.0
      %1029 = vmatprep.subr.mxu0 0.0
      %1030 = vmatpush2.msra.mxu0 0.0
      %1031 = vmatprep.subr.mxu0 0.0
      %1032 = vmatpush2.msra.mxu0 0.0
      %1033 = vmatprep.subr.mxu0 0.0
      %1034 = vmatpush2.msra.mxu0 0.0
      %1035 = vmatprep.subr.mxu0 0.0
      %1036 = vmatpush2.msra.mxu0 0.0
      %1037 = vmatprep.subr.mxu0 0.0
      %1038 = vmatpush2.msra.mxu0 0.0
      %1039 = vmatprep.subr.mxu0 0.0
      %1040 = vmatpush2.msra.mxu0 0.0
      %1041 = vmatprep.subr.mxu0 0.0
      %1042 = vmatpush2.msra.mxu0 0.0
      %1043 = vmatprep.subr.mxu0 0.0
      %1044 = vmatpush2.msra.mxu0 0.0
      %1045 = vmatprep.subr.mxu0 0.0
      %1046 = vmatpush2.msra.mxu0 0.0
      %1047 = vmatprep.subr.mxu0 0.0
      %1048 = vmatpush2.msra.mxu0 0.0
      %1049 = vmatprep.subr.mxu0 0.0
      %1050 = vmatpush2.msra.mxu0 0.0
      %1051 = vmatprep.subr.mxu0 0.0
      %1052 = vmatpush2.msra.mxu0 0.0
      %1053 = vmatprep.subr.mxu0 0.0
      %1054 = vmatpush2.msra.mxu0 0.0
      %1055 = vmatprep.mubr.f32.mxu0 0.0
      %1056 = vmatmul.mubr.f32.gmra.mxu0 %v634
      %v1057 = vpop.f32.mrf.mxu0
      %v1058 = vadd.f32 0.0, %v1057
      %v1059 = vpop.f32.mrf.mxu0
      %v1060 = vadd.f32 0.0, %v1059
      %1061 = vdwg.mxu0
      %1062 = vmatprep.subr.mxu0 0.0
      %1063 = vmatpush1.msra.mxu0 0.0
      %1064 = vmatprep.subr.mxu0 0.0
      %1065 = vmatpush1.msra.mxu0 0.0
      %1066 = vmatprep.subr.mxu0 0.0
      %1067 = vmatpush1.msra.mxu0 0.0
      %1068 = vmatprep.subr.mxu0 0.0
      %1069 = vmatpush1.msra.mxu0 0.0
      %1070 = vmatprep.subr.mxu0 0.0
      %1071 = vmatpush1.msra.mxu0 0.0
      %1072 = vmatprep.subr.mxu0 0.0
      %1073 = vmatpush1.msra.mxu0 0.0
      %1074 = vmatprep.subr.mxu0 0.0
      %1075 = vmatpush1.msra.mxu0 0.0
      %1076 = vmatprep.subr.mxu0 0.0
      %1077 = vmatpush1.msra.mxu0 0.0
      %1078 = vmatprep.subr.mxu0 %v625
      %1079 = vmatpush1.msra.mxu0 %v624
      %1080 = vmatprep.subr.mxu0 %v609
      %1081 = vmatpush1.msra.mxu0 %v608
      %1082 = vmatprep.subr.mxu0 %v593
      %1083 = vmatpush1.msra.mxu0 %v592
      %1084 = vmatprep.subr.mxu0 %v577
      %1085 = vmatpush1.msra.mxu0 %v576
      %1086 = vmatprep.subr.mxu0 %v561
      %1087 = vmatpush1.msra.mxu0 %v560
      %1088 = vmatprep.subr.mxu0 %v545
      %1089 = vmatpush1.msra.mxu0 %v544
      %1090 = vmatprep.subr.mxu0 %v529
      %1091 = vmatpush1.msra.mxu0 %v528
      %1092 = vmatprep.subr.mxu0 %v513
      %1093 = vmatpush1.msra.mxu0 %v512
      %1094 = vmatprep.subr.mxu0 0.0
      %1095 = vmatpush2.msra.mxu0 0.0
      %1096 = vmatprep.subr.mxu0 0.0
      %1097 = vmatpush2.msra.mxu0 0.0
      %1098 = vmatprep.subr.mxu0 0.0
      %1099 = vmatpush2.msra.mxu0 0.0
      %1100 = vmatprep.subr.mxu0 0.0
      %1101 = vmatpush2.msra.mxu0 0.0
      %1102 = vmatprep.subr.mxu0 0.0
      %1103 = vmatpush2.msra.mxu0 0.0
      %1104 = vmatprep.subr.mxu0 0.0
      %1105 = vmatpush2.msra.mxu0 0.0
      %1106 = vmatprep.subr.mxu0 0.0
      %1107 = vmatpush2.msra.mxu0 0.0
      %1108 = vmatprep.subr.mxu0 0.0
      %1109 = vmatpush2.msra.mxu0 0.0
      %1110 = vmatprep.subr.mxu0 0.0
      %1111 = vmatpush2.msra.mxu0 0.0
      %1112 = vmatprep.subr.mxu0 0.0
      %1113 = vmatpush2.msra.mxu0 0.0
      %1114 = vmatprep.subr.mxu0 0.0
      %1115 = vmatpush2.msra.mxu0 0.0
      %1116 = vmatprep.subr.mxu0 0.0
      %1117 = vmatpush2.msra.mxu0 0.0
      %1118 = vmatprep.subr.mxu0 0.0
      %1119 = vmatpush2.msra.mxu0 0.0
      %1120 = vmatprep.subr.mxu0 0.0
      %1121 = vmatpush2.msra.mxu0 0.0
      %1122 = vmatprep.subr.mxu0 0.0
      %1123 = vmatpush2.msra.mxu0 0.0
      %1124 = vmatprep.subr.mxu0 0.0
      %1125 = vmatpush2.msra.mxu0 0.0
      %1126 = vmatprep.mubr.f32.mxu0 0.0
      %1127 = vmatmul.mubr.f32.gmra.mxu0 %v634
      %v1128 = vpop.f32.mrf.mxu0
      %v1129 = vadd.f32 0.0, %v1128
      %v1130 = vpop.f32.mrf.mxu0
      %v1131 = vadd.f32 0.0, %v1130
      %1132 = vdwg.mxu0
      %1133 = vmatprep.subr.mxu0 0.0
      %1134 = vmatpush1.msra.mxu0 0.0
      %1135 = vmatprep.subr.mxu0 0.0
      %1136 = vmatpush1.msra.mxu0 0.0
      %1137 = vmatprep.subr.mxu0 0.0
      %1138 = vmatpush1.msra.mxu0 0.0
      %1139 = vmatprep.subr.mxu0 0.0
      %1140 = vmatpush1.msra.mxu0 0.0
      %1141 = vmatprep.subr.mxu0 0.0
      %1142 = vmatpush1.msra.mxu0 0.0
      %1143 = vmatprep.subr.mxu0 0.0
      %1144 = vmatpush1.msra.mxu0 0.0
      %1145 = vmatprep.subr.mxu0 0.0
      %1146 = vmatpush1.msra.mxu0 0.0
      %1147 = vmatprep.subr.mxu0 0.0
      %1148 = vmatpush1.msra.mxu0 0.0
      %1149 = vmatprep.subr.mxu0 %v627
      %1150 = vmatpush1.msra.mxu0 %v626
      %1151 = vmatprep.subr.mxu0 %v611
      %1152 = vmatpush1.msra.mxu0 %v610
      %1153 = vmatprep.subr.mxu0 %v595
      %1154 = vmatpush1.msra.mxu0 %v594
      %1155 = vmatprep.subr.mxu0 %v579
      %1156 = vmatpush1.msra.mxu0 %v578
      %1157 = vmatprep.subr.mxu0 %v563
      %1158 = vmatpush1.msra.mxu0 %v562
      %1159 = vmatprep.subr.mxu0 %v547
      %1160 = vmatpush1.msra.mxu0 %v546
      %1161 = vmatprep.subr.mxu0 %v531
      %1162 = vmatpush1.msra.mxu0 %v530
      %1163 = vmatprep.subr.mxu0 %v515
      %1164 = vmatpush1.msra.mxu0 %v514
      %1165 = vmatprep.subr.mxu0 0.0
      %1166 = vmatpush2.msra.mxu0 0.0
      %1167 = vmatprep.subr.mxu0 0.0
      %1168 = vmatpush2.msra.mxu0 0.0
      %1169 = vmatprep.subr.mxu0 0.0
      %1170 = vmatpush2.msra.mxu0 0.0
      %1171 = vmatprep.subr.mxu0 0.0
      %1172 = vmatpush2.msra.mxu0 0.0
      %1173 = vmatprep.subr.mxu0 0.0
      %1174 = vmatpush2.msra.mxu0 0.0
      %1175 = vmatprep.subr.mxu0 0.0
      %1176 = vmatpush2.msra.mxu0 0.0
      %1177 = vmatprep.subr.mxu0 0.0
      %1178 = vmatpush2.msra.mxu0 0.0
      %1179 = vmatprep.subr.mxu0 0.0
      %1180 = vmatpush2.msra.mxu0 0.0
      %1181 = vmatprep.subr.mxu0 0.0
      %1182 = vmatpush2.msra.mxu0 0.0
      %1183 = vmatprep.subr.mxu0 0.0
      %1184 = vmatpush2.msra.mxu0 0.0
      %1185 = vmatprep.subr.mxu0 0.0
      %1186 = vmatpush2.msra.mxu0 0.0
      %1187 = vmatprep.subr.mxu0 0.0
      %1188 = vmatpush2.msra.mxu0 0.0
      %1189 = vmatprep.subr.mxu0 0.0
      %1190 = vmatpush2.msra.mxu0 0.0
      %1191 = vmatprep.subr.mxu0 0.0
      %1192 = vmatpush2.msra.mxu0 0.0
      %1193 = vmatprep.subr.mxu0 0.0
      %1194 = vmatpush2.msra.mxu0 0.0
      %1195 = vmatprep.subr.mxu0 0.0
      %1196 = vmatpush2.msra.mxu0 0.0
      %1197 = vmatprep.mubr.f32.mxu0 0.0
      %1198 = vmatmul.mubr.f32.gmra.mxu0 %v634
      %v1199 = vpop.f32.mrf.mxu0
      %v1200 = vadd.f32 0.0, %v1199
      %v1201 = vpop.f32.mrf.mxu0
      %v1202 = vadd.f32 0.0, %v1201
      %1203 = vdwg.mxu0
      %v1206 = vlaneseq
      %v1207 = vshrl.u32 %v1206, 7
      %v1208 = vsub.s32 0, %v1207
      %v1209 = vrot.slane %v628, %v1208
      %v1210 = vlaneseq
      %v1211 = vshrl.u32 %v1210, 7
      %v1212 = vsub.s32 1, %v1211
      %v1213 = vrot.slane %v628, %v1212
      %v1214 = vlaneseq
      %v1215 = vshrl.u32 %v1214, 7
      %v1216 = vsub.s32 2, %v1215
      %v1217 = vrot.slane %v628, %v1216
      %v1218 = vlaneseq
      %v1219 = vshrl.u32 %v1218, 7
      %v1220 = vsub.s32 3, %v1219
      %v1221 = vrot.slane %v628, %v1220
      %v1222 = vlaneseq
      %v1223 = vshrl.u32 %v1222, 7
      %v1224 = vsub.s32 4, %v1223
      %v1225 = vrot.slane %v628, %v1224
      %v1226 = vlaneseq
      %v1227 = vshrl.u32 %v1226, 7
      %v1228 = vsub.s32 5, %v1227
      %v1229 = vrot.slane %v628, %v1228
      %v1230 = vlaneseq
      %v1231 = vshrl.u32 %v1230, 7
      %v1232 = vsub.s32 6, %v1231
      %v1233 = vrot.slane %v628, %v1232
      %v1234 = vlaneseq
      %v1235 = vshrl.u32 %v1234, 7
      %v1236 = vsub.s32 7, %v1235
      %v1237 = vrot.slane %v628, %v1236
      %v1238 = vlaneseq
      %v1239 = vshrl.u32 %v1238, 7
      %v1240 = vsub.s32 0, %v1239
      %v1241 = vrot.slane %v629, %v1240
      %v1242 = vlaneseq
      %v1243 = vshrl.u32 %v1242, 7
      %v1244 = vsub.s32 1, %v1243
      %v1245 = vrot.slane %v629, %v1244
      %v1246 = vlaneseq
      %v1247 = vshrl.u32 %v1246, 7
      %v1248 = vsub.s32 2, %v1247
      %v1249 = vrot.slane %v629, %v1248
      %v1250 = vlaneseq
      %v1251 = vshrl.u32 %v1250, 7
      %v1252 = vsub.s32 3, %v1251
      %v1253 = vrot.slane %v629, %v1252
      %v1254 = vlaneseq
      %v1255 = vshrl.u32 %v1254, 7
      %v1256 = vsub.s32 4, %v1255
      %v1257 = vrot.slane %v629, %v1256
      %v1258 = vlaneseq
      %v1259 = vshrl.u32 %v1258, 7
      %v1260 = vsub.s32 5, %v1259
      %v1261 = vrot.slane %v629, %v1260
      %v1262 = vlaneseq
      %v1263 = vshrl.u32 %v1262, 7
      %v1264 = vsub.s32 6, %v1263
      %v1265 = vrot.slane %v629, %v1264
      %v1266 = vlaneseq
      %v1267 = vshrl.u32 %v1266, 7
      %v1268 = vsub.s32 7, %v1267
      %v1269 = vrot.slane %v629, %v1268
      %v1286 = vmul.f32 %v703, %v1209
      %v1287 = vmul.f32 %v705, %v1213
      %v1288 = vmul.f32 %v774, %v1217
      %v1289 = vmul.f32 %v776, %v1221
      %v1290 = vmul.f32 %v845, %v1225
      %v1291 = vmul.f32 %v847, %v1229
      %v1292 = vmul.f32 %v916, %v1233
      %v1293 = vmul.f32 %v918, %v1237
      %v1294 = vmul.f32 %v987, %v1241
      %v1295 = vmul.f32 %v989, %v1245
      %v1296 = vmul.f32 %v1058, %v1249
      %v1297 = vmul.f32 %v1060, %v1253
      %v1298 = vmul.f32 %v1129, %v1257
      %v1299 = vmul.f32 %v1131, %v1261
      %v1300 = vmul.f32 %v1200, %v1265
      %v1301 = vmul.f32 %v1202, %v1269
      %v1304 = vlaneseq
      %v1305 = vshrl.u32 %v1304, 7
      %v1306 = vsub.s32 0, %v1305
      %v1307 = vrot.slane %v630, %v1306
      %v1308 = vlaneseq
      %v1309 = vshrl.u32 %v1308, 7
      %v1310 = vsub.s32 1, %v1309
      %v1311 = vrot.slane %v630, %v1310
      %v1312 = vlaneseq
      %v1313 = vshrl.u32 %v1312, 7
      %v1314 = vsub.s32 2, %v1313
      %v1315 = vrot.slane %v630, %v1314
      %v1316 = vlaneseq
      %v1317 = vshrl.u32 %v1316, 7
      %v1318 = vsub.s32 3, %v1317
      %v1319 = vrot.slane %v630, %v1318
      %v1320 = vlaneseq
      %v1321 = vshrl.u32 %v1320, 7
      %v1322 = vsub.s32 4, %v1321
      %v1323 = vrot.slane %v630, %v1322
      %v1324 = vlaneseq
      %v1325 = vshrl.u32 %v1324, 7
      %v1326 = vsub.s32 5, %v1325
      %v1327 = vrot.slane %v630, %v1326
      %v1328 = vlaneseq
      %v1329 = vshrl.u32 %v1328, 7
      %v1330 = vsub.s32 6, %v1329
      %v1331 = vrot.slane %v630, %v1330
      %v1332 = vlaneseq
      %v1333 = vshrl.u32 %v1332, 7
      %v1334 = vsub.s32 7, %v1333
      %v1335 = vrot.slane %v630, %v1334
      %v1336 = vlaneseq
      %v1337 = vshrl.u32 %v1336, 7
      %v1338 = vsub.s32 0, %v1337
      %v1339 = vrot.slane %v631, %v1338
      %v1340 = vlaneseq
      %v1341 = vshrl.u32 %v1340, 7
      %v1342 = vsub.s32 1, %v1341
      %v1343 = vrot.slane %v631, %v1342
      %v1344 = vlaneseq
      %v1345 = vshrl.u32 %v1344, 7
      %v1346 = vsub.s32 2, %v1345
      %v1347 = vrot.slane %v631, %v1346
      %v1348 = vlaneseq
      %v1349 = vshrl.u32 %v1348, 7
      %v1350 = vsub.s32 3, %v1349
      %v1351 = vrot.slane %v631, %v1350
      %v1352 = vlaneseq
      %v1353 = vshrl.u32 %v1352, 7
      %v1354 = vsub.s32 4, %v1353
      %v1355 = vrot.slane %v631, %v1354
      %v1356 = vlaneseq
      %v1357 = vshrl.u32 %v1356, 7
      %v1358 = vsub.s32 5, %v1357
      %v1359 = vrot.slane %v631, %v1358
      %v1360 = vlaneseq
      %v1361 = vshrl.u32 %v1360, 7
      %v1362 = vsub.s32 6, %v1361
      %v1363 = vrot.slane %v631, %v1362
      %v1364 = vlaneseq
      %v1365 = vshrl.u32 %v1364, 7
      %v1366 = vsub.s32 7, %v1365
      %v1367 = vrot.slane %v631, %v1366
      %v1384 = vadd.f32 %v1286, %v1307
      %v1385 = vadd.f32 %v1287, %v1311
      %v1386 = vadd.f32 %v1288, %v1315
      %v1387 = vadd.f32 %v1289, %v1319
      %v1388 = vadd.f32 %v1290, %v1323
      %v1389 = vadd.f32 %v1291, %v1327
      %v1390 = vadd.f32 %v1292, %v1331
      %v1391 = vadd.f32 %v1293, %v1335
      %v1392 = vadd.f32 %v1294, %v1339
      %v1393 = vadd.f32 %v1295, %v1343
      %v1394 = vadd.f32 %v1296, %v1347
      %v1395 = vadd.f32 %v1297, %v1351
      %v1396 = vadd.f32 %v1298, %v1355
      %v1397 = vadd.f32 %v1299, %v1359
      %v1398 = vadd.f32 %v1300, %v1363
      %v1399 = vadd.f32 %v1301, %v1367
      %v1400 = vmax.f32 %v1384, 0.0
      %v1401 = vmax.f32 %v1385, 0.0
      %v1402 = vmax.f32 %v1386, 0.0
      %v1403 = vmax.f32 %v1387, 0.0
      %v1404 = vmax.f32 %v1388, 0.0
      %v1405 = vmax.f32 %v1389, 0.0
      %v1406 = vmax.f32 %v1390, 0.0
      %v1407 = vmax.f32 %v1391, 0.0
      %v1408 = vmax.f32 %v1392, 0.0
      %v1409 = vmax.f32 %v1393, 0.0
      %v1410 = vmax.f32 %v1394, 0.0
      %v1411 = vmax.f32 %v1395, 0.0
      %v1412 = vmax.f32 %v1396, 0.0
      %v1413 = vmax.f32 %v1397, 0.0
      %v1414 = vmax.f32 %v1398, 0.0
      %v1415 = vmax.f32 %v1399, 0.0
      %1416 = vst [vmem:[%s349] sm:$0xff] %v1400
      %1417 = vst [vmem:[%s349 + $0x8] sm:$0xff] %v1401
      %1418 = vst [vmem:[%s349 + $0x10] sm:$0xff] %v1402
      %1419 = vst [vmem:[%s349 + $0x18] sm:$0xff] %v1403
      %1420 = vst [vmem:[%s349 + $0x20] sm:$0xff] %v1404
      %1421 = vst [vmem:[%s349 + $0x28] sm:$0xff] %v1405
      %1422 = vst [vmem:[%s349 + $0x30] sm:$0xff] %v1406
      %1423 = vst [vmem:[%s349 + $0x38] sm:$0xff] %v1407
      %1424 = vst [vmem:[%s349 + $0x40] sm:$0xff] %v1408
      %1425 = vst [vmem:[%s349 + $0x48] sm:$0xff] %v1409
      %1426 = vst [vmem:[%s349 + $0x50] sm:$0xff] %v1410
      %1427 = vst [vmem:[%s349 + $0x58] sm:$0xff] %v1411
      %1428 = vst [vmem:[%s349 + $0x60] sm:$0xff] %v1412
      %1429 = vst [vmem:[%s349 + $0x68] sm:$0xff] %v1413
      %1430 = vst [vmem:[%s349 + $0x70] sm:$0xff] %v1414
      %1431 = vst [vmem:[%s349 + $0x78] sm:$0xff] %v1415
      %p1432 = scmp.lt.s32.totalorder %s22, 1
      %s1433 = scalar_select %p1432, %s22, 1
      %p1434 = scmp.lt.s32.totalorder %s23, 1
      %s1435 = scalar_select %p1434, %s23, 1
      %s1436 = smul.addr %s1435, 16
      %s1437 = smul.addr %s1433, 32
      %s1438 = sadd.s32 %s1436, %s1437
      %s1439 = smul.addr %s1438, 8
      %s1440 = scalar_lea.vmem %s7, %s1439
      // Predicated region
      $region49: #{dsconv_pallas.1} parent=47 // pred_check
        %p1441 = pneg %p213
      $region50: #{dsconv_pallas.1} parent=47 // pred_check_branch
        %1443 = sbr.rel (%p1441) target = $region52
      $region51: #{dsconv_pallas.1} parent=47 // pred_region
        _
      $region52: #{dsconv_pallas.1} parent=47 // pred_fallthru
        _
    $region48: #{dsconv_pallas.1} parent=5 // pred_fallthru
      _
    %p1444 = scmp.le.s32.totalorder 2, %s13
    // Predicated region
    $region53: #{dsconv_pallas.1} parent=5 // pred_check
      %p1445 = pneg %p1444
    $region54: #{dsconv_pallas.1} parent=5 // pred_check_branch
      %1447 = sbr.rel (%p1445) target = $region56
    $region55: #{dsconv_pallas.1} parent=5 // pred_region
      %s1448 = ssub.s32 %s13, 2
      // Predicated region
      $region57: #{dsconv_pallas.1} parent=55 // pred_check
        %p1449 = pneg %p219
      $region58: #{dsconv_pallas.1} parent=55 // pred_check_branch
        %1451 = sbr.rel (%p1449) target = $region60
      $region59: #{dsconv_pallas.1} parent=55 // pred_region
        %p1452 = scmp.lt.s32.totalorder %s24, 1
        %s1453 = scalar_select %p1452, %s24, 1
        %p1454 = scmp.lt.s32.totalorder %s25, 1
        %s1455 = scalar_select %p1454, %s25, 1
        %s1456 = smul.addr %s1455, 16
        %s1457 = smul.addr %s1453, 32
        %s1458 = sadd.s32 %s1456, %s1457
        %s1459 = smul.addr %s1458, 8
        %s1460 = scalar_lea.vmem %s7, %s1459
      $region60: #{dsconv_pallas.1} parent=55 // pred_fallthru
        _
    $region56: #{dsconv_pallas.1} parent=5 // pred_fallthru
      _
  $region6: #{dsconv_pallas.1} parent=0 // loop_footer
    %s17 = sadd.s32 1, %s13
  $region7: #{dsconv_pallas.1} parent=0 // loop_footer_branch
    %12 = sbr.rel target = $region3
  $region8: #{dsconv_pallas.1} parent=0 // loop_exit
    _

</llo_original>
